<compile_context>
chip_gen: v7x
topology: tpu7x:2x2x1
jax: 0.10.0
libtpu: 0.0.40
codegen_flags: <defaults>
</compile_context>

<pallas_src>
import jax
import jax.numpy as jnp
from jax import lax
from jax.experimental import pallas as pl
from jax.experimental.pallas import tpu as pltpu

# ----------------------------- model sizes ---------------------------------
B, S = 2, 8                  # batch, seq
H = 32                       # logical hidden size
HP = 128                     # hidden padded to full lane width
NUM_HEADS = 2
HEAD_DIM = H // NUM_HEADS    # 16
FFN = 64                     # logical FFN width
FP = 128                     # FFN padded
NUM_CLASSES = 7
CP = 128                     # classes padded
QKVP = 128                   # fused q|k|v output width (3*H = 96 real)
VOCAB = 50
N_SEG = 2
DR_RATE = 0.5                # dropout rate (identity in eval mode)
LN_EPS = 1e-12
NEG_INF = -1e9
OUT_ROWS = 8                 # sublane-dense logits store

# rows of the packed (16, 128) bias / layernorm-vector operand
(R_LNE_G, R_LNE_B, R_BQKV, R_BO, R_LN1_G, R_LN1_B,
 R_BF1, R_BF2, R_LN2_G, R_LN2_B, R_BPOOL, R_BCLS) = range(12)
VEC_ROWS = 16


# ----------------------- fused forward kernel ------------------------------
def _make_kernel(nb_block):
    """Build the fused kernel for `nb_block` batch items per grid step."""
    nbs = nb_block * S

    def kernel(vlen_ref,                       # (B,) int32, SMEM scalar prefetch
               emb_ref,                        # (nb, S, HP) f32
               vecs_ref,                       # (16, 128) f32 packed vectors
               wqkv_ref,                       # (HP, QKVP) bf16
               wo_ref,                         # (H, HP)    bf16
               wf1_ref,                        # (HP, FP)   bf16
               wf2_ref,                        # (FP, HP)   bf16
               wp_ref,                         # (HP, HP)   bf16
               wc_ref,                         # (HP, CP)   bf16
               out_ref):                       # (nb, OUT_ROWS, CP) f32
        f32 = jnp.float32
        bf16 = jnp.bfloat16
        base = pl.program_id(0) * nb_block

        vecs = vecs_ref[...]                   # one small load, sliced below

        def row(r):
            return vecs[r:r + 1, :]            # (1, 128)

        # lane mask selecting the H real hidden lanes out of HP padded ones
        lane = lax.broadcasted_iota(jnp.int32, (1, HP), 1)
        lane_mask = (lane < H).astype(f32)
        inv_h = 1.0 / H

        def layer_norm(x, g, beta):
            # stats over the H real lanes only (padded lanes are always zero)
            mu = jnp.sum(x, axis=-1, keepdims=True) * inv_h
            d = (x - mu) * lane_mask
            var = jnp.sum(d * d, axis=-1, keepdims=True) * inv_h
            return d * lax.rsqrt(var + LN_EPS) * g + beta

        # ---------------- embedding layernorm ----------------
        x = layer_norm(emb_ref[...].reshape(nbs, HP),
                       row(R_LNE_G), row(R_LNE_B))                   # (nbs, HP)

        # ---------------- fused Q|K|V projection ----------------
        qkv = jnp.dot(x.astype(bf16), wqkv_ref[...],
                      preferred_element_type=f32) + row(R_BQKV)      # (nbs, 128)

        # attention bias from valid_length (gen_attention_mask fused in-kernel)
        key_pos = lax.broadcasted_iota(jnp.int32, (nb_block, S, S), 2)
        if nb_block == 1:
            bias = jnp.where(key_pos < vlen_ref[base], 0.0, NEG_INF)
        else:
            nb_idx = lax.broadcasted_iota(jnp.int32, (nb_block, S, S), 0)
            vlen_sel = jnp.where(nb_idx == 0, vlen_ref[base], 0)
            for nbi in range(1, nb_block):
                vlen_sel = jnp.where(nb_idx == nbi, vlen_ref[base + nbi],
                                     vlen_sel)
            bias = jnp.where(key_pos < vlen_sel, 0.0, NEG_INF)
        bias = bias.astype(f32)                                      # (nb, S, S)

        # -------- multi-head self-attention (static 2-head unroll) --------
        scale = 1.0 / (HEAD_DIM ** 0.5)
        dn_qk = (((2,), (2,)), ((0,), (0,)))     # contract head_dim, batch nb
        dn_pv = (((2,), (1,)), ((0,), (0,)))
        ctx_heads = []
        for h in range(NUM_HEADS):
            c0 = h * HEAD_DIM
            q_h = qkv[:, c0:c0 + HEAD_DIM].reshape(nb_block, S, HEAD_DIM)
            k_h = qkv[:, H + c0:H + c0 + HEAD_DIM].reshape(nb_block, S, HEAD_DIM)
            v_h = qkv[:, 2 * H + c0:2 * H + c0 + HEAD_DIM].reshape(
                nb_block, S, HEAD_DIM)

            s_h = lax.dot_general(q_h.astype(bf16), k_h.astype(bf16), dn_qk,
                                  preferred_element_type=f32) * scale + bias
            m = jnp.max(s_h, axis=-1, keepdims=True)
            p = jnp.exp(s_h - m)
            p = p * pl.reciprocal(jnp.sum(p, axis=-1, keepdims=True),
                                  approx=True)
            c_h = lax.dot_general(p.astype(bf16), v_h.astype(bf16), dn_pv,
                                  preferred_element_type=f32)        # (nb,S,HD)
            ctx_heads.append(c_h.reshape(nbs, HEAD_DIM))

        ctx = jnp.concatenate(ctx_heads, axis=-1)                    # (nbs, H)

        # single-matmul output projection
        attn = jnp.dot(ctx.astype(bf16), wo_ref[...],
                       preferred_element_type=f32) + row(R_BO)       # (nbs, HP)

        # ---------------- residual + LN1 ----------------
        h1 = layer_norm(x + attn, row(R_LN1_G), row(R_LN1_B))

        # ---------------- FFN ----------------
        f = jnp.dot(h1.astype(bf16), wf1_ref[...],
                    preferred_element_type=f32) + row(R_BF1)
        # TODO(synk): jax.nn.gelu uses the tanh approximation; PyTorch nn.GELU
        # default is exact erf (tiny numerical deviation).
        f = jax.nn.gelu(f)
        f = jnp.dot(f.astype(bf16), wf2_ref[...],
                    preferred_element_type=f32) + row(R_BF2)

        # ---------------- residual + LN2 ----------------
        h2 = layer_norm(h1 + f, row(R_LN2_G), row(R_LN2_B))          # (nbs, HP)

        # ---------------- pooler: tanh(W_p @ h2[CLS]) ----------------
        cls_tok = h2.reshape(nb_block, S, HP)[:, 0, :]               # (nb, HP)
        pooled = jnp.tanh(
            jnp.dot(cls_tok.astype(bf16), wp_ref[...],
                    preferred_element_type=f32) + row(R_BPOOL))

        # dropout(p=DR_RATE) is identity in eval mode.
        # TODO(synk): training-mode stochastic dropout (pltpu.prng_*) not emitted.

        # ---------------- classifier ----------------
        logits = (jnp.dot(pooled.astype(bf16), wc_ref[...],
                          preferred_element_type=f32) + row(R_BCLS))  # (nb, CP)

        # lane/sublane-dense unmasked store; wrapper reads row 0, slices to 7.
        out_ref[...] = jnp.broadcast_to(logits[:, None, :],
                                        (nb_block, OUT_ROWS, CP))

    return kernel


# ------------------- parameter init (deterministic) ------------------------
def init_params(key):
    ks = jax.random.split(key, 20)
    n = lambda k, shp: jax.random.normal(k, shp, jnp.float32) * 0.02
    bf16 = jnp.bfloat16

    def pad2(w, rows, cols):
        return jnp.zeros((rows, cols), jnp.float32).at[
            : w.shape[0], : w.shape[1]].set(w)

    # fused Q|K|V weight: columns [Wq(32) | Wk(32) | Wv(32) | 0-pad]
    wq, wk, wv = n(ks[3], (H, H)), n(ks[4], (H, H)), n(ks[5], (H, H))
    w_qkv = (jnp.zeros((HP, QKVP), jnp.float32)
             .at[:H, 0:H].set(wq)
             .at[:H, H:2 * H].set(wk)
             .at[:H, 2 * H:3 * H].set(wv))

    # single output-projection weight: rows = concatenated heads (= H rows)
    w_o = pad2(n(ks[6], (H, H)), H, HP)

    # packed bias / layernorm vectors (padded lanes stay exactly zero)
    vecs = jnp.zeros((VEC_ROWS, 128), jnp.float32)
    vecs = vecs.at[R_LNE_G, :H].set(1.0)
    vecs = vecs.at[R_LN1_G, :H].set(1.0)
    vecs = vecs.at[R_LN2_G, :H].set(1.0)
    vecs = vecs.at[R_LNE_B, :H].set(n(ks[11], (H,)))
    vecs = vecs.at[R_BQKV, :3 * H].set(n(ks[12], (3 * H,)))
    vecs = vecs.at[R_BO, :H].set(n(ks[13], (H,)))
    vecs = vecs.at[R_LN1_B, :H].set(n(ks[14], (H,)))
    vecs = vecs.at[R_BF1, :FFN].set(n(ks[15], (FFN,)))
    vecs = vecs.at[R_BF2, :H].set(n(ks[16], (H,)))
    vecs = vecs.at[R_LN2_B, :H].set(n(ks[17], (H,)))
    vecs = vecs.at[R_BPOOL, :H].set(n(ks[18], (H,)))
    vecs = vecs.at[R_BCLS, :NUM_CLASSES].set(n(ks[19], (NUM_CLASSES,)))

    return {
        # embeddings, zero-padded H -> HP (padded lanes stay 0 end-to-end)
        "word_emb": pad2(n(ks[0], (VOCAB, H)), VOCAB, HP),
        "pos_emb":  pad2(n(ks[1], (S, H)), S, HP),
        "seg_emb":  pad2(n(ks[2], (N_SEG, H)), N_SEG, HP),
        "vecs": vecs,
        "w_qkv": w_qkv.astype(bf16),
        "w_o": w_o.astype(bf16),
        "w_ffn1": pad2(n(ks[7], (H, FFN)), HP, FP).astype(bf16),
        "w_ffn2": pad2(n(ks[8], (FFN, H)), FP, HP).astype(bf16),
        "w_pool": pad2(n(ks[9], (H, H)), HP, HP).astype(bf16),
        # BERTClassifier.__init__: nn.Linear(hidden_size, num_classes)
        "w_cls": pad2(n(ks[10], (H, NUM_CLASSES)), HP, CP).astype(bf16),
    }


def _batch_block():
    """Batch items processed per grid step (chip-aware)."""
    kind = ""
    try:
        kind = jax.devices()[0].device_kind.lower()
    except Exception:
        pass
    if "v7" in kind or "7x" in kind:
        return 1        # 2 TensorCores: grid=(B,) 'parallel' shards the batch
    return B            # single-TC (v5e/v6e): one grid step, (B*S, HP) rows


# ------------------- forward: BERTClassifier.forward -----------------------
def bert_classifier_forward(params, token_ids, valid_length, segment_ids):
    p = params

    # synthetic mini-BERT embeddings (gather = JAX glue; everything else fused)
    emb = (jnp.take(p["word_emb"], token_ids, axis=0)
           + jnp.take(p["seg_emb"], segment_ids, axis=0)
           + p["pos_emb"][None, :, :])                                # (B,S,HP)

    nb = _batch_block()
    grid = (B // nb,)
    const2 = lambda i, vlen: (0, 0)

    grid_spec = pltpu.PrefetchScalarGridSpec(
        num_scalar_prefetch=1,
        grid=grid,
        in_specs=[
            pl.BlockSpec((nb, S, HP), lambda i, vlen: (i, 0, 0)),     # emb
            pl.BlockSpec((VEC_ROWS, 128), const2),                    # vecs
            pl.BlockSpec((HP, QKVP), const2),                         # w_qkv
            pl.BlockSpec((H, HP), const2),                            # w_o
            pl.BlockSpec((HP, FP), const2),                           # w_ffn1
            pl.BlockSpec((FP, HP), const2),                           # w_ffn2
            pl.BlockSpec((HP, HP), const2),                           # w_pool
            pl.BlockSpec((HP, CP), const2),                           # w_cls
        ],
        out_specs=pl.BlockSpec((nb, OUT_ROWS, CP),
                               lambda i, vlen: (i, 0, 0)),
    )

    logits_pad = pl.pallas_call(
        _make_kernel(nb),
        grid_spec=grid_spec,
        out_shape=jax.ShapeDtypeStruct((B, OUT_ROWS, CP), jnp.float32),
        compiler_params=pltpu.CompilerParams(
            dimension_semantics=("parallel",)),
    )(valid_length.astype(jnp.int32),
      emb,
      p["vecs"], p["w_qkv"], p["w_o"],
      p["w_ffn1"], p["w_ffn2"], p["w_pool"], p["w_cls"])

    # row 0 carries the logits; slice padded 128 -> 7 real classes.
    return logits_pad[:, 0, :NUM_CLASSES]


if __name__ == "__main__":
    key = jax.random.PRNGKey(0)
    k_tok, k_seg, k_par = jax.random.split(key, 3)

    token_ids = jax.random.randint(k_tok, (B, S), 0, VOCAB, dtype=jnp.int32)
    valid_length = jnp.array([5, 8], dtype=jnp.int32)
    segment_ids = jax.random.randint(k_seg, (B, S), 0, N_SEG, dtype=jnp.int32)

    params = init_params(k_par)

    fwd = jax.jit(bert_classifier_forward)
    logits = fwd(params, token_ids, valid_length, segment_ids)
    logits = jax.block_until_ready(logits)
    assert logits.shape == (B, NUM_CLASSES)
    assert bool(jnp.all(jnp.isfinite(logits)))
    print("KERNEL_OK")
</pallas_src>

<mosaic_0001>
module attributes {stable_mosaic.version = 11 : i64} {
  func.func @kernel(%arg0: i32, %arg1: memref<2xi32, #tpu.memory_space<smem>>, %arg2: memref<2x8x128xf32, #tpu.memory_space<vmem>>, %arg3: memref<16x128xf32, #tpu.memory_space<vmem>>, %arg4: memref<128x128xbf16, #tpu.memory_space<vmem>>, %arg5: memref<32x128xbf16, #tpu.memory_space<vmem>>, %arg6: memref<128x128xbf16, #tpu.memory_space<vmem>>, %arg7: memref<128x128xbf16, #tpu.memory_space<vmem>>, %arg8: memref<128x128xbf16, #tpu.memory_space<vmem>>, %arg9: memref<128x128xbf16, #tpu.memory_space<vmem>>, %arg10: memref<2x8x128xf32, #tpu.memory_space<vmem>>) attributes {dimension_semantics = [#tpu.dimension_semantics<parallel>], iteration_bounds = array<i64: 1>, scalar_prefetch = 1 : i64, scratch_operands = 0 : i64, tpu.core_type = #tpu.core_type<tc>, window_params = [{transform_indices = @transform_0, window_bounds = array<i64: 2, 8, 128>}, {pipeline_mode = #tpu.pipeline_mode<synchronous>, transform_indices = @transform_1, window_bounds = array<i64: 16, 128>}, {pipeline_mode = #tpu.pipeline_mode<synchronous>, transform_indices = @transform_2, window_bounds = array<i64: 128, 128>}, {pipeline_mode = #tpu.pipeline_mode<synchronous>, transform_indices = @transform_3, window_bounds = array<i64: 32, 128>}, {pipeline_mode = #tpu.pipeline_mode<synchronous>, transform_indices = @transform_4, window_bounds = array<i64: 128, 128>}, {pipeline_mode = #tpu.pipeline_mode<synchronous>, transform_indices = @transform_5, window_bounds = array<i64: 128, 128>}, {pipeline_mode = #tpu.pipeline_mode<synchronous>, transform_indices = @transform_6, window_bounds = array<i64: 128, 128>}, {pipeline_mode = #tpu.pipeline_mode<synchronous>, transform_indices = @transform_7, window_bounds = array<i64: 128, 128>}, {transform_indices = @transform_8, window_bounds = array<i64: 2, 8, 128>}]} {
    %c2_i32 = arith.constant 2 : i32
    %0 = arith.muli %arg0, %c2_i32 : i32
    %c0 = arith.constant 0 : index
    %c0_0 = arith.constant 0 : index
    %1 = vector.load %arg3[%c0, %c0_0] : memref<16x128xf32, #tpu.memory_space<vmem>>, vector<16x128xf32>
    %2 = tpu.iota {dimensions = array<i32: 1>} : vector<1x128xi32>
    %c32_i32 = arith.constant 32 : i32
    %3 = vector.broadcast %c32_i32 : i32 to vector<1x128xi32>
    %4 = arith.cmpi slt, %2, %3 : vector<1x128xi32>
    %5 = arith.extui %4 : vector<1x128xi1> to vector<1x128xi32>
    %6 = arith.sitofp %5 : vector<1x128xi32> to vector<1x128xf32>
    %c0_1 = arith.constant 0 : index
    %c0_2 = arith.constant 0 : index
    %c0_3 = arith.constant 0 : index
    %7 = vector.load %arg2[%c0_1, %c0_2, %c0_3] : memref<2x8x128xf32, #tpu.memory_space<vmem>>, vector<2x8x128xf32>
    %8 = vector.shape_cast %7 : vector<2x8x128xf32> to vector<16x128xf32>
    %9 = vector.extract_strided_slice %1 {offsets = [0, 0], sizes = [1, 128], strides = [1, 1]} : vector<16x128xf32> to vector<1x128xf32>
    %10 = vector.extract_strided_slice %1 {offsets = [1, 0], sizes = [1, 128], strides = [1, 1]} : vector<16x128xf32> to vector<1x128xf32>
    %cst = arith.constant dense<0.000000e+00> : vector<16xf32>
    %11 = vector.multi_reduction <add>, %8, %cst [1] : vector<16x128xf32> to vector<16xf32>
    %12 = vector.shape_cast %11 : vector<16xf32> to vector<16x1xf32>
    %cst_4 = arith.constant 3.125000e-02 : f32
    %13 = vector.broadcast %cst_4 : f32 to vector<16x1xf32>
    %14 = arith.mulf %12, %13 : vector<16x1xf32>
    %15 = vector.broadcast %14 : vector<16x1xf32> to vector<16x128xf32>
    %16 = arith.subf %8, %15 : vector<16x128xf32>
    %17 = vector.broadcast %6 : vector<1x128xf32> to vector<16x128xf32>
    %18 = arith.mulf %16, %17 : vector<16x128xf32>
    %19 = arith.mulf %18, %18 : vector<16x128xf32>
    %cst_5 = arith.constant dense<0.000000e+00> : vector<16xf32>
    %20 = vector.multi_reduction <add>, %19, %cst_5 [1] : vector<16x128xf32> to vector<16xf32>
    %21 = vector.shape_cast %20 : vector<16xf32> to vector<16x1xf32>
    %cst_6 = arith.constant 3.125000e-02 : f32
    %22 = vector.broadcast %cst_6 : f32 to vector<16x1xf32>
    %23 = arith.mulf %21, %22 : vector<16x1xf32>
    %cst_7 = arith.constant 9.99999996E-13 : f32
    %24 = vector.broadcast %cst_7 : f32 to vector<16x1xf32>
    %25 = arith.addf %23, %24 : vector<16x1xf32>
    %26 = math.rsqrt %25 : vector<16x1xf32>
    %27 = vector.broadcast %26 : vector<16x1xf32> to vector<16x128xf32>
    %28 = arith.mulf %18, %27 : vector<16x128xf32>
    %29 = vector.broadcast %9 : vector<1x128xf32> to vector<16x128xf32>
    %30 = arith.mulf %28, %29 : vector<16x128xf32>
    %31 = vector.broadcast %10 : vector<1x128xf32> to vector<16x128xf32>
    %32 = arith.addf %30, %31 : vector<16x128xf32>
    %33 = arith.truncf %32 : vector<16x128xf32> to vector<16x128xbf16>
    %c0_8 = arith.constant 0 : index
    %c0_9 = arith.constant 0 : index
    %34 = vector.load %arg4[%c0_8, %c0_9] : memref<128x128xbf16, #tpu.memory_space<vmem>>, vector<128x128xbf16>
    %cst_10 = arith.constant dense<0.000000e+00> : vector<16x128xf32>
    %35 = tpu.matmul %33, %34, %cst_10 {dimension_numbers = #tpu.dot_dimension_numbers<[1], [0], [0], [1], [0, 0, 1, 1], [], []>} : vector<16x128xbf16>, vector<128x128xbf16>, vector<16x128xf32> -> vector<16x128xf32>
    %36 = vector.extract_strided_slice %1 {offsets = [2, 0], sizes = [1, 128], strides = [1, 1]} : vector<16x128xf32> to vector<1x128xf32>
    %37 = vector.broadcast %36 : vector<1x128xf32> to vector<16x128xf32>
    %38 = arith.addf %35, %37 : vector<16x128xf32>
    %39 = tpu.iota {dimensions = array<i32: 2>} : vector<2x8x8xi32>
    %40 = tpu.iota {dimensions = array<i32: 0>} : vector<2x8x8xi32>
    %c0_i32 = arith.constant 0 : i32
    %41 = vector.broadcast %c0_i32 : i32 to vector<2x8x8xi32>
    %42 = arith.cmpi eq, %40, %41 : vector<2x8x8xi32>
    %43 = arith.index_cast %0 : i32 to index
    %44 = memref.load %arg1[%43] : memref<2xi32, #tpu.memory_space<smem>>
    %c0_i32_11 = arith.constant 0 : i32
    %45 = vector.broadcast %44 : i32 to vector<2x8x8xi32>
    %46 = vector.broadcast %c0_i32_11 : i32 to vector<2x8x8xi32>
    %47 = arith.select %42, %45, %46 : vector<2x8x8xi1>, vector<2x8x8xi32>
    %c1_i32 = arith.constant 1 : i32
    %48 = vector.broadcast %c1_i32 : i32 to vector<2x8x8xi32>
    %49 = arith.cmpi eq, %40, %48 : vector<2x8x8xi32>
    %c1_i32_12 = arith.constant 1 : i32
    %50 = arith.addi %0, %c1_i32_12 : i32
    %51 = arith.index_cast %50 : i32 to index
    %52 = memref.load %arg1[%51] : memref<2xi32, #tpu.memory_space<smem>>
    %53 = vector.broadcast %52 : i32 to vector<2x8x8xi32>
    %54 = arith.select %49, %53, %47 : vector<2x8x8xi1>, vector<2x8x8xi32>
    %55 = arith.cmpi slt, %39, %54 : vector<2x8x8xi32>
    %cst_13 = arith.constant 0.000000e+00 : f32
    %cst_14 = arith.constant -1.000000e+09 : f32
    %56 = vector.broadcast %cst_13 : f32 to vector<2x8x8xf32>
    %57 = vector.broadcast %cst_14 : f32 to vector<2x8x8xf32>
    %58 = arith.select %55, %56, %57 : vector<2x8x8xi1>, vector<2x8x8xf32>
    %59 = vector.extract_strided_slice %38 {offsets = [0, 0], sizes = [16, 16], strides = [1, 1]} : vector<16x128xf32> to vector<16x16xf32>
    %60 = vector.shape_cast %59 : vector<16x16xf32> to vector<2x8x16xf32>
    %61 = vector.extract_strided_slice %38 {offsets = [0, 32], sizes = [16, 16], strides = [1, 1]} : vector<16x128xf32> to vector<16x16xf32>
    %62 = vector.shape_cast %61 : vector<16x16xf32> to vector<2x8x16xf32>
    %63 = vector.extract_strided_slice %38 {offsets = [0, 64], sizes = [16, 16], strides = [1, 1]} : vector<16x128xf32> to vector<16x16xf32>
    %64 = vector.shape_cast %63 : vector<16x16xf32> to vector<2x8x16xf32>
    %65 = arith.truncf %60 : vector<2x8x16xf32> to vector<2x8x16xbf16>
    %66 = arith.truncf %62 : vector<2x8x16xf32> to vector<2x8x16xbf16>
    %cst_15 = arith.constant dense<0.000000e+00> : vector<2x8x8xf32>
    %67 = tpu.matmul %65, %66, %cst_15 {dimension_numbers = #tpu.dot_dimension_numbers<[2], [2], [1], [1], [0, 0, 0, 1, 1, 1], [0], [0]>} : vector<2x8x16xbf16>, vector<2x8x16xbf16>, vector<2x8x8xf32> -> vector<2x8x8xf32>
    %cst_16 = arith.constant 2.500000e-01 : f32
    %68 = vector.broadcast %cst_16 : f32 to vector<2x8x8xf32>
    %69 = arith.mulf %67, %68 : vector<2x8x8xf32>
    %70 = arith.addf %69, %58 : vector<2x8x8xf32>
    %cst_17 = arith.constant dense<0xFF800000> : vector<2x8xf32>
    %71 = vector.multi_reduction <maximumf>, %70, %cst_17 [2] : vector<2x8x8xf32> to vector<2x8xf32>
    %72 = vector.shape_cast %71 : vector<2x8xf32> to vector<2x8x1xf32>
    %73 = vector.broadcast %72 : vector<2x8x1xf32> to vector<2x8x8xf32>
    %74 = arith.subf %70, %73 : vector<2x8x8xf32>
    %75 = math.exp %74 : vector<2x8x8xf32>
    %cst_18 = arith.constant dense<0.000000e+00> : vector<2x8xf32>
    %76 = vector.multi_reduction <add>, %75, %cst_18 [2] : vector<2x8x8xf32> to vector<2x8xf32>
    %77 = vector.shape_cast %76 : vector<2x8xf32> to vector<2x8x1xf32>
    %78 = tpu.reciprocal %77 {approx = true} : vector<2x8x1xf32> -> vector<2x8x1xf32>
    %79 = vector.broadcast %78 : vector<2x8x1xf32> to vector<2x8x8xf32>
    %80 = arith.mulf %75, %79 : vector<2x8x8xf32>
    %81 = arith.truncf %80 : vector<2x8x8xf32> to vector<2x8x8xbf16>
    %82 = arith.truncf %64 : vector<2x8x16xf32> to vector<2x8x16xbf16>
    %cst_19 = arith.constant dense<0.000000e+00> : vector<2x8x16xf32>
    %83 = tpu.matmul %81, %82, %cst_19 {dimension_numbers = #tpu.dot_dimension_numbers<[2], [1], [1], [2], [0, 0, 0, 1, 1, 2], [0], [0]>} : vector<2x8x8xbf16>, vector<2x8x16xbf16>, vector<2x8x16xf32> -> vector<2x8x16xf32>
    %84 = vector.shape_cast %83 : vector<2x8x16xf32> to vector<16x16xf32>
    %85 = vector.extract_strided_slice %38 {offsets = [0, 16], sizes = [16, 16], strides = [1, 1]} : vector<16x128xf32> to vector<16x16xf32>
    %86 = vector.shape_cast %85 : vector<16x16xf32> to vector<2x8x16xf32>
    %87 = vector.extract_strided_slice %38 {offsets = [0, 48], sizes = [16, 16], strides = [1, 1]} : vector<16x128xf32> to vector<16x16xf32>
    %88 = vector.shape_cast %87 : vector<16x16xf32> to vector<2x8x16xf32>
    %89 = vector.extract_strided_slice %38 {offsets = [0, 80], sizes = [16, 16], strides = [1, 1]} : vector<16x128xf32> to vector<16x16xf32>
    %90 = vector.shape_cast %89 : vector<16x16xf32> to vector<2x8x16xf32>
    %91 = arith.truncf %86 : vector<2x8x16xf32> to vector<2x8x16xbf16>
    %92 = arith.truncf %88 : vector<2x8x16xf32> to vector<2x8x16xbf16>
    %cst_20 = arith.constant dense<0.000000e+00> : vector<2x8x8xf32>
    %93 = tpu.matmul %91, %92, %cst_20 {dimension_numbers = #tpu.dot_dimension_numbers<[2], [2], [1], [1], [0, 0, 0, 1, 1, 1], [0], [0]>} : vector<2x8x16xbf16>, vector<2x8x16xbf16>, vector<2x8x8xf32> -> vector<2x8x8xf32>
    %cst_21 = arith.constant 2.500000e-01 : f32
    %94 = vector.broadcast %cst_21 : f32 to vector<2x8x8xf32>
    %95 = arith.mulf %93, %94 : vector<2x8x8xf32>
    %96 = arith.addf %95, %58 : vector<2x8x8xf32>
    %cst_22 = arith.constant dense<0xFF800000> : vector<2x8xf32>
    %97 = vector.multi_reduction <maximumf>, %96, %cst_22 [2] : vector<2x8x8xf32> to vector<2x8xf32>
    %98 = vector.shape_cast %97 : vector<2x8xf32> to vector<2x8x1xf32>
    %99 = vector.broadcast %98 : vector<2x8x1xf32> to vector<2x8x8xf32>
    %100 = arith.subf %96, %99 : vector<2x8x8xf32>
    %101 = math.exp %100 : vector<2x8x8xf32>
    %cst_23 = arith.constant dense<0.000000e+00> : vector<2x8xf32>
    %102 = vector.multi_reduction <add>, %101, %cst_23 [2] : vector<2x8x8xf32> to vector<2x8xf32>
    %103 = vector.shape_cast %102 : vector<2x8xf32> to vector<2x8x1xf32>
    %104 = tpu.reciprocal %103 {approx = true} : vector<2x8x1xf32> -> vector<2x8x1xf32>
    %105 = vector.broadcast %104 : vector<2x8x1xf32> to vector<2x8x8xf32>
    %106 = arith.mulf %101, %105 : vector<2x8x8xf32>
    %107 = arith.truncf %106 : vector<2x8x8xf32> to vector<2x8x8xbf16>
    %108 = arith.truncf %90 : vector<2x8x16xf32> to vector<2x8x16xbf16>
    %cst_24 = arith.constant dense<0.000000e+00> : vector<2x8x16xf32>
    %109 = tpu.matmul %107, %108, %cst_24 {dimension_numbers = #tpu.dot_dimension_numbers<[2], [1], [1], [2], [0, 0, 0, 1, 1, 2], [0], [0]>} : vector<2x8x8xbf16>, vector<2x8x16xbf16>, vector<2x8x16xf32> -> vector<2x8x16xf32>
    %110 = vector.shape_cast %109 : vector<2x8x16xf32> to vector<16x16xf32>
    %111 = tpu.concatenate %84, %110 in 1 : vector<16x16xf32>, vector<16x16xf32> -> vector<16x32xf32>
    %112 = arith.truncf %111 : vector<16x32xf32> to vector<16x32xbf16>
    %c0_25 = arith.constant 0 : index
    %c0_26 = arith.constant 0 : index
    %113 = vector.load %arg5[%c0_25, %c0_26] : memref<32x128xbf16, #tpu.memory_space<vmem>>, vector<32x128xbf16>
    %cst_27 = arith.constant dense<0.000000e+00> : vector<16x128xf32>
    %114 = tpu.matmul %112, %113, %cst_27 {dimension_numbers = #tpu.dot_dimension_numbers<[1], [0], [0], [1], [0, 0, 1, 1], [], []>} : vector<16x32xbf16>, vector<32x128xbf16>, vector<16x128xf32> -> vector<16x128xf32>
    %115 = vector.extract_strided_slice %1 {offsets = [3, 0], sizes = [1, 128], strides = [1, 1]} : vector<16x128xf32> to vector<1x128xf32>
    %116 = vector.broadcast %115 : vector<1x128xf32> to vector<16x128xf32>
    %117 = arith.addf %114, %116 : vector<16x128xf32>
    %118 = arith.addf %32, %117 : vector<16x128xf32>
    %119 = vector.extract_strided_slice %1 {offsets = [4, 0], sizes = [1, 128], strides = [1, 1]} : vector<16x128xf32> to vector<1x128xf32>
    %120 = vector.extract_strided_slice %1 {offsets = [5, 0], sizes = [1, 128], strides = [1, 1]} : vector<16x128xf32> to vector<1x128xf32>
    %cst_28 = arith.constant dense<0.000000e+00> : vector<16xf32>
    %121 = vector.multi_reduction <add>, %118, %cst_28 [1] : vector<16x128xf32> to vector<16xf32>
    %122 = vector.shape_cast %121 : vector<16xf32> to vector<16x1xf32>
    %cst_29 = arith.constant 3.125000e-02 : f32
    %123 = vector.broadcast %cst_29 : f32 to vector<16x1xf32>
    %124 = arith.mulf %122, %123 : vector<16x1xf32>
    %125 = vector.broadcast %124 : vector<16x1xf32> to vector<16x128xf32>
    %126 = arith.subf %118, %125 : vector<16x128xf32>
    %127 = vector.broadcast %6 : vector<1x128xf32> to vector<16x128xf32>
    %128 = arith.mulf %126, %127 : vector<16x128xf32>
    %129 = arith.mulf %128, %128 : vector<16x128xf32>
    %cst_30 = arith.constant dense<0.000000e+00> : vector<16xf32>
    %130 = vector.multi_reduction <add>, %129, %cst_30 [1] : vector<16x128xf32> to vector<16xf32>
    %131 = vector.shape_cast %130 : vector<16xf32> to vector<16x1xf32>
    %cst_31 = arith.constant 3.125000e-02 : f32
    %132 = vector.broadcast %cst_31 : f32 to vector<16x1xf32>
    %133 = arith.mulf %131, %132 : vector<16x1xf32>
    %cst_32 = arith.constant 9.99999996E-13 : f32
    %134 = vector.broadcast %cst_32 : f32 to vector<16x1xf32>
    %135 = arith.addf %133, %134 : vector<16x1xf32>
    %136 = math.rsqrt %135 : vector<16x1xf32>
    %137 = vector.broadcast %136 : vector<16x1xf32> to vector<16x128xf32>
    %138 = arith.mulf %128, %137 : vector<16x128xf32>
    %139 = vector.broadcast %119 : vector<1x128xf32> to vector<16x128xf32>
    %140 = arith.mulf %138, %139 : vector<16x128xf32>
    %141 = vector.broadcast %120 : vector<1x128xf32> to vector<16x128xf32>
    %142 = arith.addf %140, %141 : vector<16x128xf32>
    %143 = arith.truncf %142 : vector<16x128xf32> to vector<16x128xbf16>
    %c0_33 = arith.constant 0 : index
    %c0_34 = arith.constant 0 : index
    %144 = vector.load %arg6[%c0_33, %c0_34] : memref<128x128xbf16, #tpu.memory_space<vmem>>, vector<128x128xbf16>
    %cst_35 = arith.constant dense<0.000000e+00> : vector<16x128xf32>
    %145 = tpu.matmul %143, %144, %cst_35 {dimension_numbers = #tpu.dot_dimension_numbers<[1], [0], [0], [1], [0, 0, 1, 1], [], []>} : vector<16x128xbf16>, vector<128x128xbf16>, vector<16x128xf32> -> vector<16x128xf32>
    %146 = vector.extract_strided_slice %1 {offsets = [6, 0], sizes = [1, 128], strides = [1, 1]} : vector<16x128xf32> to vector<1x128xf32>
    %147 = vector.broadcast %146 : vector<1x128xf32> to vector<16x128xf32>
    %148 = arith.addf %145, %147 : vector<16x128xf32>
    %149 = arith.mulf %148, %148 : vector<16x128xf32>
    %150 = arith.mulf %148, %149 : vector<16x128xf32>
    %cst_36 = arith.constant 4.471500e-02 : f32
    %151 = vector.broadcast %cst_36 : f32 to vector<16x128xf32>
    %152 = arith.mulf %151, %150 : vector<16x128xf32>
    %153 = arith.addf %148, %152 : vector<16x128xf32>
    %cst_37 = arith.constant 0.797884583 : f32
    %154 = vector.broadcast %cst_37 : f32 to vector<16x128xf32>
    %155 = arith.mulf %154, %153 : vector<16x128xf32>
    %156 = math.tanh %155 : vector<16x128xf32>
    %cst_38 = arith.constant 1.000000e+00 : f32
    %157 = vector.broadcast %cst_38 : f32 to vector<16x128xf32>
    %158 = arith.addf %157, %156 : vector<16x128xf32>
    %cst_39 = arith.constant 5.000000e-01 : f32
    %159 = vector.broadcast %cst_39 : f32 to vector<16x128xf32>
    %160 = arith.mulf %159, %158 : vector<16x128xf32>
    %161 = arith.mulf %148, %160 : vector<16x128xf32>
    %162 = arith.truncf %161 : vector<16x128xf32> to vector<16x128xbf16>
    %c0_40 = arith.constant 0 : index
    %c0_41 = arith.constant 0 : index
    %163 = vector.load %arg7[%c0_40, %c0_41] : memref<128x128xbf16, #tpu.memory_space<vmem>>, vector<128x128xbf16>
    %cst_42 = arith.constant dense<0.000000e+00> : vector<16x128xf32>
    %164 = tpu.matmul %162, %163, %cst_42 {dimension_numbers = #tpu.dot_dimension_numbers<[1], [0], [0], [1], [0, 0, 1, 1], [], []>} : vector<16x128xbf16>, vector<128x128xbf16>, vector<16x128xf32> -> vector<16x128xf32>
    %165 = vector.extract_strided_slice %1 {offsets = [7, 0], sizes = [1, 128], strides = [1, 1]} : vector<16x128xf32> to vector<1x128xf32>
    %166 = vector.broadcast %165 : vector<1x128xf32> to vector<16x128xf32>
    %167 = arith.addf %164, %166 : vector<16x128xf32>
    %168 = arith.addf %142, %167 : vector<16x128xf32>
    %169 = vector.extract_strided_slice %1 {offsets = [8, 0], sizes = [1, 128], strides = [1, 1]} : vector<16x128xf32> to vector<1x128xf32>
    %170 = vector.extract_strided_slice %1 {offsets = [9, 0], sizes = [1, 128], strides = [1, 1]} : vector<16x128xf32> to vector<1x128xf32>
    %cst_43 = arith.constant dense<0.000000e+00> : vector<16xf32>
    %171 = vector.multi_reduction <add>, %168, %cst_43 [1] : vector<16x128xf32> to vector<16xf32>
    %172 = vector.shape_cast %171 : vector<16xf32> to vector<16x1xf32>
    %cst_44 = arith.constant 3.125000e-02 : f32
    %173 = vector.broadcast %cst_44 : f32 to vector<16x1xf32>
    %174 = arith.mulf %172, %173 : vector<16x1xf32>
    %175 = vector.broadcast %174 : vector<16x1xf32> to vector<16x128xf32>
    %176 = arith.subf %168, %175 : vector<16x128xf32>
    %177 = vector.broadcast %6 : vector<1x128xf32> to vector<16x128xf32>
    %178 = arith.mulf %176, %177 : vector<16x128xf32>
    %179 = arith.mulf %178, %178 : vector<16x128xf32>
    %cst_45 = arith.constant dense<0.000000e+00> : vector<16xf32>
    %180 = vector.multi_reduction <add>, %179, %cst_45 [1] : vector<16x128xf32> to vector<16xf32>
    %181 = vector.shape_cast %180 : vector<16xf32> to vector<16x1xf32>
    %cst_46 = arith.constant 3.125000e-02 : f32
    %182 = vector.broadcast %cst_46 : f32 to vector<16x1xf32>
    %183 = arith.mulf %181, %182 : vector<16x1xf32>
    %cst_47 = arith.constant 9.99999996E-13 : f32
    %184 = vector.broadcast %cst_47 : f32 to vector<16x1xf32>
    %185 = arith.addf %183, %184 : vector<16x1xf32>
    %186 = math.rsqrt %185 : vector<16x1xf32>
    %187 = vector.broadcast %186 : vector<16x1xf32> to vector<16x128xf32>
    %188 = arith.mulf %178, %187 : vector<16x128xf32>
    %189 = vector.broadcast %169 : vector<1x128xf32> to vector<16x128xf32>
    %190 = arith.mulf %188, %189 : vector<16x128xf32>
    %191 = vector.broadcast %170 : vector<1x128xf32> to vector<16x128xf32>
    %192 = arith.addf %190, %191 : vector<16x128xf32>
    %193 = vector.shape_cast %192 : vector<16x128xf32> to vector<2x8x128xf32>
    %194 = vector.extract_strided_slice %193 {offsets = [0, 0, 0], sizes = [2, 1, 128], strides = [1, 1, 1]} : vector<2x8x128xf32> to vector<2x1x128xf32>
    %195 = vector.shape_cast %194 : vector<2x1x128xf32> to vector<2x128xf32>
    %196 = arith.truncf %195 : vector<2x128xf32> to vector<2x128xbf16>
    %c0_48 = arith.constant 0 : index
    %c0_49 = arith.constant 0 : index
    %197 = vector.load %arg8[%c0_48, %c0_49] : memref<128x128xbf16, #tpu.memory_space<vmem>>, vector<128x128xbf16>
    %cst_50 = arith.constant dense<0.000000e+00> : vector<2x128xf32>
    %198 = tpu.matmul %196, %197, %cst_50 {dimension_numbers = #tpu.dot_dimension_numbers<[1], [0], [0], [1], [0, 0, 1, 1], [], []>} : vector<2x128xbf16>, vector<128x128xbf16>, vector<2x128xf32> -> vector<2x128xf32>
    %199 = vector.extract_strided_slice %1 {offsets = [10, 0], sizes = [1, 128], strides = [1, 1]} : vector<16x128xf32> to vector<1x128xf32>
    %200 = vector.broadcast %199 : vector<1x128xf32> to vector<2x128xf32>
    %201 = arith.addf %198, %200 : vector<2x128xf32>
    %202 = math.tanh %201 : vector<2x128xf32>
    %203 = arith.truncf %202 : vector<2x128xf32> to vector<2x128xbf16>
    %c0_51 = arith.constant 0 : index
    %c0_52 = arith.constant 0 : index
    %204 = vector.load %arg9[%c0_51, %c0_52] : memref<128x128xbf16, #tpu.memory_space<vmem>>, vector<128x128xbf16>
    %cst_53 = arith.constant dense<0.000000e+00> : vector<2x128xf32>
    %205 = tpu.matmul %203, %204, %cst_53 {dimension_numbers = #tpu.dot_dimension_numbers<[1], [0], [0], [1], [0, 0, 1, 1], [], []>} : vector<2x128xbf16>, vector<128x128xbf16>, vector<2x128xf32> -> vector<2x128xf32>
    %206 = vector.extract_strided_slice %1 {offsets = [11, 0], sizes = [1, 128], strides = [1, 1]} : vector<16x128xf32> to vector<1x128xf32>
    %207 = vector.broadcast %206 : vector<1x128xf32> to vector<2x128xf32>
    %208 = arith.addf %205, %207 : vector<2x128xf32>
    %209 = vector.shape_cast %208 : vector<2x128xf32> to vector<2x1x128xf32>
    %210 = vector.shape_cast %209 : vector<2x1x128xf32> to vector<2x1x128xf32>
    %211 = vector.broadcast %210 : vector<2x1x128xf32> to vector<2x8x128xf32>
    %c0_54 = arith.constant 0 : index
    %c0_55 = arith.constant 0 : index
    %c0_56 = arith.constant 0 : index
    %212 = vector.load %arg10[%c0_54, %c0_55, %c0_56] : memref<2x8x128xf32, #tpu.memory_space<vmem>>, vector<2x8x128xf32>
    tpu.vector_store %arg10[%c0_54, %c0_55, %c0_56], %211 {strides = array<i32>} : memref<2x8x128xf32, #tpu.memory_space<vmem>>, vector<2x8x128xf32>,
    return
  }
  func.func @transform_0(%arg0: i32, %arg1: memref<2xi32, #tpu.memory_space<smem>>) -> (i32, i32, i32) {
    %c0_i32 = arith.constant 0 : i32
    %c0_i32_0 = arith.constant 0 : i32
    %c0_i32_1 = arith.constant 0 : i32
    return %arg0, %c0_i32, %c0_i32_0 : i32, i32, i32
  }
  func.func @transform_1(%arg0: i32, %arg1: memref<2xi32, #tpu.memory_space<smem>>) -> (i32, i32) {
    %c0_i32 = arith.constant 0 : i32
    %c0_i32_0 = arith.constant 0 : i32
    %c0_i32_1 = arith.constant 0 : i32
    return %c0_i32, %c0_i32_0 : i32, i32
  }
  func.func @transform_2(%arg0: i32, %arg1: memref<2xi32, #tpu.memory_space<smem>>) -> (i32, i32) {
    %c0_i32 = arith.constant 0 : i32
    %c0_i32_0 = arith.constant 0 : i32
    %c0_i32_1 = arith.constant 0 : i32
    return %c0_i32, %c0_i32_0 : i32, i32
  }
  func.func @transform_3(%arg0: i32, %arg1: memref<2xi32, #tpu.memory_space<smem>>) -> (i32, i32) {
    %c0_i32 = arith.constant 0 : i32
    %c0_i32_0 = arith.constant 0 : i32
    %c0_i32_1 = arith.constant 0 : i32
    return %c0_i32, %c0_i32_0 : i32, i32
  }
  func.func @transform_4(%arg0: i32, %arg1: memref<2xi32, #tpu.memory_space<smem>>) -> (i32, i32) {
    %c0_i32 = arith.constant 0 : i32
    %c0_i32_0 = arith.constant 0 : i32
    %c0_i32_1 = arith.constant 0 : i32
    return %c0_i32, %c0_i32_0 : i32, i32
  }
  func.func @transform_5(%arg0: i32, %arg1: memref<2xi32, #tpu.memory_space<smem>>) -> (i32, i32) {
    %c0_i32 = arith.constant 0 : i32
    %c0_i32_0 = arith.constant 0 : i32
    %c0_i32_1 = arith.constant 0 : i32
    return %c0_i32, %c0_i32_0 : i32, i32
  }
  func.func @transform_6(%arg0: i32, %arg1: memref<2xi32, #tpu.memory_space<smem>>) -> (i32, i32) {
    %c0_i32 = arith.constant 0 : i32
    %c0_i32_0 = arith.constant 0 : i32
    %c0_i32_1 = arith.constant 0 : i32
    return %c0_i32, %c0_i32_0 : i32, i32
  }
  func.func @transform_7(%arg0: i32, %arg1: memref<2xi32, #tpu.memory_space<smem>>) -> (i32, i32) {
    %c0_i32 = arith.constant 0 : i32
    %c0_i32_0 = arith.constant 0 : i32
    %c0_i32_1 = arith.constant 0 : i32
    return %c0_i32, %c0_i32_0 : i32, i32
  }
  func.func @transform_8(%arg0: i32, %arg1: memref<2xi32, #tpu.memory_space<smem>>) -> (i32, i32, i32) {
    %c0_i32 = arith.constant 0 : i32
    %c0_i32_0 = arith.constant 0 : i32
    %c0_i32_1 = arith.constant 0 : i32
    return %arg0, %c0_i32, %c0_i32_0 : i32, i32, i32
  }
}

</mosaic_0001>

<llo_original>
// kernel: bert_classifier_forward.1
$region0: #{bert_classifier_forward.1}
  #allocation0 [shape = 'u32[]', space=smem, size = 0x4, offset = 0x4, fixed_abs, tag = 'smem constant byte address 0x4 - core index']
  #allocation1 [shape = 'u32[144,128]{1,0:T(1,128)}', space=vmem, size = 0x12000, scoped, tag = 'internal scratch']
  #allocation2 [shape = 's32[1]{0}', space=sflag, size = 0x4, scoped, tag = 'scoped memory for bert_classifier_forward.1']
  #allocation3 [shape = 'u8[512]{0}', space=smem, size = 0x200, scoped, tag = 'prefetched SMEM operand 0']
  %s0 = inlined_call_operand.vmem [shape: s32[2], index: 0, kind: input, shape index: {}]
  %s1 = inlined_call_operand.vmem [shape: f32[2,8,128], index: 1, kind: input, shape index: {}]
  %s2 = inlined_call_operand.vmem [shape: f32[16,128], index: 2, kind: input, shape index: {}]
  %s3 = inlined_call_operand.vmem [shape: bf16[128,128], index: 3, kind: input, shape index: {}]
  %s4 = inlined_call_operand.vmem [shape: bf16[32,128], index: 4, kind: input, shape index: {}]
  %s5 = inlined_call_operand.vmem [shape: bf16[128,128], index: 5, kind: input, shape index: {}]
  %s6 = inlined_call_operand.vmem [shape: bf16[128,128], index: 6, kind: input, shape index: {}]
  %s7 = inlined_call_operand.vmem [shape: bf16[128,128], index: 7, kind: input, shape index: {}]
  %s8 = inlined_call_operand.vmem [shape: bf16[128,128], index: 8, kind: input, shape index: {}]
  %s9 = inlined_call_operand.vmem [shape: f32[2,8,128], index: 9, kind: output, shape index: {}]
  %s10 = sld [smem:[#allocation0]]
  $region42: #{bert_classifier_forward.1} parent=0
    _
  %s12 = ssub.s32 1, %s10
  %s13 = scalar_select 0, %s12, %s10
  %s14 = sshll.u32 %s0, 4
  %s15 = int_to_ptr.vmem [resolvable:$true] %s14
  %17 = dma.vmem_to_smem %s15, 16, [#allocation3], [#allocation2]
  %18 = dma.done [#allocation2], 16
  %19 = sfence
  // Predicated region
  $region2: #{bert_classifier_forward.1} parent=0 // pred_check
    _
  $region3: #{bert_classifier_forward.1} parent=0 // pred_check_branch
    %21 = sbr.rel (0) target = $region5
  $region4: #{bert_classifier_forward.1} parent=0 // pred_region
    _
  $region5: #{bert_classifier_forward.1} parent=0 // pred_fallthru
    _
  // Predicated region
  $region6: #{bert_classifier_forward.1} parent=0 // pred_check
    _
  $region7: #{bert_classifier_forward.1} parent=0 // pred_check_branch
    %23 = sbr.rel (0) target = $region9
  $region8: #{bert_classifier_forward.1} parent=0 // pred_region
    _
  $region9: #{bert_classifier_forward.1} parent=0 // pred_fallthru
    _
  // Predicated region
  $region10: #{bert_classifier_forward.1} parent=0 // pred_check
    _
  $region11: #{bert_classifier_forward.1} parent=0 // pred_check_branch
    %25 = sbr.rel (0) target = $region13
  $region12: #{bert_classifier_forward.1} parent=0 // pred_region
    _
  $region13: #{bert_classifier_forward.1} parent=0 // pred_fallthru
    _
  // Predicated region
  $region14: #{bert_classifier_forward.1} parent=0 // pred_check
    _
  $region15: #{bert_classifier_forward.1} parent=0 // pred_check_branch
    %27 = sbr.rel (0) target = $region17
  $region16: #{bert_classifier_forward.1} parent=0 // pred_region
    _
  $region17: #{bert_classifier_forward.1} parent=0 // pred_fallthru
    _
  // Predicated region
  $region18: #{bert_classifier_forward.1} parent=0 // pred_check
    _
  $region19: #{bert_classifier_forward.1} parent=0 // pred_check_branch
    %29 = sbr.rel (0) target = $region21
  $region20: #{bert_classifier_forward.1} parent=0 // pred_region
    _
  $region21: #{bert_classifier_forward.1} parent=0 // pred_fallthru
    _
  // Predicated region
  $region22: #{bert_classifier_forward.1} parent=0 // pred_check
    _
  $region23: #{bert_classifier_forward.1} parent=0 // pred_check_branch
    %31 = sbr.rel (0) target = $region25
  $region24: #{bert_classifier_forward.1} parent=0 // pred_region
    _
  $region25: #{bert_classifier_forward.1} parent=0 // pred_fallthru
    _
  // Predicated region
  $region26: #{bert_classifier_forward.1} parent=0 // pred_check
    _
  $region27: #{bert_classifier_forward.1} parent=0 // pred_check_branch
    %33 = sbr.rel (0) target = $region29
  $region28: #{bert_classifier_forward.1} parent=0 // pred_region
    _
  $region29: #{bert_classifier_forward.1} parent=0 // pred_fallthru
    _
  // Predicated region
  $region30: #{bert_classifier_forward.1} parent=0 // pred_check
    _
  $region31: #{bert_classifier_forward.1} parent=0 // pred_check_branch
    %35 = sbr.rel (0) target = $region33
  $region32: #{bert_classifier_forward.1} parent=0 // pred_region
    _
  $region33: #{bert_classifier_forward.1} parent=0 // pred_fallthru
    _
  %s37 = smul.u32 0, 2
  %v38 = vld [vmem:[%s2] sm:$0xff]
  %v39 = vld [vmem:[%s2 + $0x8] sm:$0xff]
  %v40 = vlaneseq
  %v41 = vand.u32 %v40, 127
  %vm42 = vcmp.lt.s32.totalorder %v41, 32
  %v43 = vsel %vm42, 1, 0
  %v44 = vcvt.s32.f32 %v43
  %v45 = vld [vmem:[%s1] sm:$0xff]
  %v46 = vld [vmem:[%s1 + $0x8] sm:$0xff]
  %47 = vadd.xlane.f32.xlu0 %v45
  %v48 = vpop.xlane.xlu0 %47
  %49 = vadd.xlane.f32.xlu0 %v46
  %v50 = vpop.xlane.xlu0 %49
  %v51 = vmul.f32 %v48, 0.03125
  %v52 = vmul.f32 %v50, 0.03125
  %v53 = vsub.f32 %v45, %v51
  %v54 = vsub.f32 %v46, %v52
  %v55 = vmul.f32 %v53, %v44
  %v56 = vmul.f32 %v54, %v44
  %v57 = vmul.f32 %v55, %v55
  %v58 = vmul.f32 %v56, %v56
  %59 = vadd.xlane.f32.xlu0 %v57
  %v60 = vpop.xlane.xlu0 %59
  %61 = vadd.xlane.f32.xlu0 %v58
  %v62 = vpop.xlane.xlu0 %61
  %v63 = vmul.f32 %v60, 0.03125
  %v64 = vmul.f32 %v62, 0.03125
  %v65 = vadd.f32 %v63, 1e-12
  %v66 = vadd.f32 %v64, 1e-12
  %v67 = vrsqrt.pop %v65
  %v68 = vrsqrt.pop %v66
  %v69 = vmul.f32 %v55, %v67
  %v70 = vmul.f32 %v56, %v68
  %v71 = vlaneseq
  %v72 = vshrl.u32 %v71, 7
  %v73 = vsub.s32 0, %v72
  %v74 = vrot.slane %v38, %v73
  %v75 = vmul.f32 %v69, %v74
  %v76 = vmul.f32 %v70, %v74
  %v77 = vlaneseq
  %v78 = vshrl.u32 %v77, 7
  %v79 = vsub.s32 1, %v78
  %v80 = vrot.slane %v38, %v79
  %v81 = vadd.f32 %v75, %v80
  %v82 = vadd.f32 %v76, %v80
  %v83 = vpack.c.bf16 %v82, %v81
  %v84 = vld [vmem:[%s3] sm:$0xf]
  %v85 = vld [vmem:[%s3 + $0x4] sm:$0xf]
  %v86 = vld [vmem:[%s3 + $0x8] sm:$0xf]
  %v87 = vld [vmem:[%s3 + $0xc] sm:$0xf]
  %v88 = vld [vmem:[%s3 + $0x10] sm:$0xf]
  %v89 = vld [vmem:[%s3 + $0x14] sm:$0xf]
  %v90 = vld [vmem:[%s3 + $0x18] sm:$0xf]
  %v91 = vld [vmem:[%s3 + $0x1c] sm:$0xf]
  %v92 = vld [vmem:[%s3 + $0x20] sm:$0xf]
  %v93 = vld [vmem:[%s3 + $0x24] sm:$0xf]
  %v94 = vld [vmem:[%s3 + $0x28] sm:$0xf]
  %v95 = vld [vmem:[%s3 + $0x2c] sm:$0xf]
  %v96 = vld [vmem:[%s3 + $0x30] sm:$0xf]
  %v97 = vld [vmem:[%s3 + $0x34] sm:$0xf]
  %v98 = vld [vmem:[%s3 + $0x38] sm:$0xf]
  %v99 = vld [vmem:[%s3 + $0x3c] sm:$0xf]
  %v100 = vlaneseq
  %v101 = vshrl.u32 %v100, 7
  %v102 = vsub.s32 2, %v101
  %v103 = vrot.slane %v38, %v102
  %v120 = vunpack.c.l.b16 %v84
  %v121 = vunpack.c.l.b16 %v85
  %v122 = vunpack.c.l.b16 %v86
  %v123 = vunpack.c.l.b16 %v87
  %v124 = vunpack.c.l.b16 %v88
  %v125 = vunpack.c.l.b16 %v89
  %v126 = vunpack.c.l.b16 %v90
  %v127 = vunpack.c.l.b16 %v91
  %v128 = vunpack.c.l.b16 %v92
  %v129 = vunpack.c.l.b16 %v93
  %v130 = vunpack.c.l.b16 %v94
  %v131 = vunpack.c.l.b16 %v95
  %v132 = vunpack.c.l.b16 %v96
  %v133 = vunpack.c.l.b16 %v97
  %v134 = vunpack.c.l.b16 %v98
  %v135 = vunpack.c.l.b16 %v99
  %v136 = vpack.c.b16 %v121, %v120
  %v137 = vpack.c.b16 %v123, %v122
  %v138 = vpack.c.b16 %v125, %v124
  %v139 = vpack.c.b16 %v127, %v126
  %v140 = vpack.c.b16 %v129, %v128
  %v141 = vpack.c.b16 %v131, %v130
  %v142 = vpack.c.b16 %v133, %v132
  %v143 = vpack.c.b16 %v135, %v134
  %152 = vmatprep.subr.bf16.mxu0 0
  %153 = vmatpush1.bf16.msra.mxu0 %v136
  %154 = vmatprep.subr.bf16.mxu0 0
  %155 = vmatpush1.bf16.msra.mxu0 %v137
  %156 = vmatprep.subr.bf16.mxu0 0
  %157 = vmatpush1.bf16.msra.mxu0 %v138
  %158 = vmatprep.subr.bf16.mxu0 0
  %159 = vmatpush1.bf16.msra.mxu0 %v139
  %160 = vmatprep.subr.bf16.mxu0 0
  %161 = vmatpush1.bf16.msra.mxu0 %v140
  %162 = vmatprep.subr.bf16.mxu0 0
  %163 = vmatpush1.bf16.msra.mxu0 %v141
  %164 = vmatprep.subr.bf16.mxu0 0
  %165 = vmatpush1.bf16.msra.mxu0 %v142
  %166 = vmatprep.subr.bf16.mxu0 0
  %167 = vmatpush1.bf16.msra.mxu0 %v143
  %168 = vmatprep.subr.bf16.mxu0 0
  %169 = vmatpush1.bf16.msra.mxu0 0
  %170 = vmatprep.subr.bf16.mxu0 0
  %171 = vmatpush1.bf16.msra.mxu0 0
  %172 = vmatprep.subr.bf16.mxu0 0
  %173 = vmatpush1.bf16.msra.mxu0 0
  %174 = vmatprep.subr.bf16.mxu0 0
  %175 = vmatpush1.bf16.msra.mxu0 0
  %176 = vmatprep.subr.bf16.mxu0 0
  %177 = vmatpush1.bf16.msra.mxu0 0
  %178 = vmatprep.subr.bf16.mxu0 0
  %179 = vmatpush1.bf16.msra.mxu0 0
  %180 = vmatprep.subr.bf16.mxu0 0
  %181 = vmatpush1.bf16.msra.mxu0 0
  %182 = vmatprep.subr.bf16.mxu0 0
  %183 = vmatpush1.bf16.msra.mxu0 0
  %184 = vmatprep.mubr.bf16.mxu0 0
  %185 = vmatmul.mubr.bf16.gmra.mrb[0].mxu0 %v83
  %v186 = vpop.f32.mrb[0].mxu0
  %v187 = vadd.f32 %v103, %v186
  %v188 = vpop.f32.mrb[0].mxu0
  %v189 = vpop.f32.mrb[0].mxu0
  %v190 = vadd.f32 %v103, %v189
  %v191 = vpop.f32.mrb[0].mxu0
  %192 = vdwg.mxu0
  %s193 = sld [smem:[#allocation3 + %s37]]
  %v194 = vstv %s193
  %s195 = sadd.s32 %s37, 1
  %s196 = sld [smem:[#allocation3 + %s195]]
  %v197 = vstv %s196
  %vm198 = vcmp.lt.s32.totalorder %v41, %v194
  %vm199 = vcmp.lt.s32.totalorder %v41, %v197
  %v200 = vsel %vm198, 0.0, -1e+09
  %v201 = vsel %vm199, 0.0, -1e+09
  %v202 = vpack.c.bf16 %v187, %v187
  %v203 = vpack.c.bf16 %v190, %v190
  %205 = vrot.lane.b32.xlu0 %v202, 96
  %v206 = vpop.permute.xlu0 %205
  %vm207 = vcmask 130048
  %v209 = vsel %vm207, %v202, 0
  %v212 = vsel %vm207, %v206, 0
  %214 = vmatprep.subr.bf16.mxu0 0
  %215 = vmatpush1.bf16.xpose.msra.mxu0 %v212
  %216 = vmatprep.subr.bf16.mxu0 0
  %217 = vmatpush1.bf16.xpose.msra.mxu0 0
  %218 = vmatprep.subr.bf16.mxu0 0
  %219 = vmatpush1.bf16.xpose.msra.mxu0 0
  %220 = vmatprep.subr.bf16.mxu0 0
  %221 = vmatpush1.bf16.xpose.msra.mxu0 0
  %222 = vmatprep.subr.bf16.mxu0 0
  %223 = vmatpush1.bf16.xpose.msra.mxu0 0
  %224 = vmatprep.subr.bf16.mxu0 0
  %225 = vmatpush1.bf16.xpose.msra.mxu0 0
  %226 = vmatprep.subr.bf16.mxu0 0
  %227 = vmatpush1.bf16.xpose.msra.mxu0 0
  %228 = vmatprep.subr.bf16.mxu0 0
  %229 = vmatpush1.bf16.xpose.msra.mxu0 0
  %230 = vmatprep.subr.bf16.mxu0 0
  %231 = vmatpush1.bf16.xpose.msra.mxu0 0
  %232 = vmatprep.subr.bf16.mxu0 0
  %233 = vmatpush1.bf16.xpose.msra.mxu0 0
  %234 = vmatprep.subr.bf16.mxu0 0
  %235 = vmatpush1.bf16.xpose.msra.mxu0 0
  %236 = vmatprep.subr.bf16.mxu0 0
  %237 = vmatpush1.bf16.xpose.msra.mxu0 0
  %238 = vmatprep.subr.bf16.mxu0 0
  %239 = vmatpush1.bf16.xpose.msra.mxu0 0
  %240 = vmatprep.subr.bf16.mxu0 0
  %241 = vmatpush1.bf16.xpose.msra.mxu0 0
  %242 = vmatprep.subr.bf16.mxu0 0
  %243 = vmatpush1.bf16.xpose.msra.mxu0 0
  %244 = vmatprep.subr.bf16.mxu0 0
  %245 = vmatpush1.bf16.xpose.msra.mxu0 0
  %246 = vmatprep.mubr.bf16.mxu0 0
  %247 = vmatmul.mubr.bf16.gmra.mrb[0].mxu0 %v209
  %v248 = vpop.f32.mrb[0].mxu0
  %v249 = vadd.f32 0.0, %v248
  %v250 = vpop.f32.mrb[0].mxu0
  %v251 = vpop.f32.mrb[0].mxu0
  %v252 = vpop.f32.mrb[0].mxu0
  %253 = vdwg.mxu0
  %255 = vrot.lane.b32.xlu0 %v203, 96
  %v256 = vpop.permute.xlu0 %255
  %v258 = vsel %vm207, %v203, 0
  %v261 = vsel %vm207, %v256, 0
  %263 = vmatprep.subr.bf16.mxu0 0
  %264 = vmatpush1.bf16.xpose.msra.mxu0 %v261
  %265 = vmatprep.subr.bf16.mxu0 0
  %266 = vmatpush1.bf16.xpose.msra.mxu0 0
  %267 = vmatprep.subr.bf16.mxu0 0
  %268 = vmatpush1.bf16.xpose.msra.mxu0 0
  %269 = vmatprep.subr.bf16.mxu0 0
  %270 = vmatpush1.bf16.xpose.msra.mxu0 0
  %271 = vmatprep.subr.bf16.mxu0 0
  %272 = vmatpush1.bf16.xpose.msra.mxu0 0
  %273 = vmatprep.subr.bf16.mxu0 0
  %274 = vmatpush1.bf16.xpose.msra.mxu0 0
  %275 = vmatprep.subr.bf16.mxu0 0
  %276 = vmatpush1.bf16.xpose.msra.mxu0 0
  %277 = vmatprep.subr.bf16.mxu0 0
  %278 = vmatpush1.bf16.xpose.msra.mxu0 0
  %279 = vmatprep.subr.bf16.mxu0 0
  %280 = vmatpush1.bf16.xpose.msra.mxu0 0
  %281 = vmatprep.subr.bf16.mxu0 0
  %282 = vmatpush1.bf16.xpose.msra.mxu0 0
  %283 = vmatprep.subr.bf16.mxu0 0
  %284 = vmatpush1.bf16.xpose.msra.mxu0 0
  %285 = vmatprep.subr.bf16.mxu0 0
  %286 = vmatpush1.bf16.xpose.msra.mxu0 0
  %287 = vmatprep.subr.bf16.mxu0 0
  %288 = vmatpush1.bf16.xpose.msra.mxu0 0
  %289 = vmatprep.subr.bf16.mxu0 0
  %290 = vmatpush1.bf16.xpose.msra.mxu0 0
  %291 = vmatprep.subr.bf16.mxu0 0
  %292 = vmatpush1.bf16.xpose.msra.mxu0 0
  %293 = vmatprep.subr.bf16.mxu0 0
  %294 = vmatpush1.bf16.xpose.msra.mxu0 0
  %295 = vmatprep.mubr.bf16.mxu0 0
  %296 = vmatmul.mubr.bf16.gmra.mrb[0].mxu0 %v258
  %v297 = vpop.f32.mrb[0].mxu0
  %v298 = vadd.f32 0.0, %v297
  %v299 = vpop.f32.mrb[0].mxu0
  %v300 = vpop.f32.mrb[0].mxu0
  %v301 = vpop.f32.mrb[0].mxu0
  %302 = vdwg.mxu0
  %v303 = vmul.f32 %v249, 0.25
  %v304 = vmul.f32 %v298, 0.25
  %v305 = vadd.f32 %v303, %v200
  %v306 = vadd.f32 %v304, %v201
  %vm307 = vcmask 64512
  %v308 = vsel %vm307, %v305, -inf
  %309 = vmax.xlane.f32.xlu0 %v308
  %v310 = vpop.xlane.xlu0 %309
  %v311 = vsel %vm307, %v306, -inf
  %312 = vmax.xlane.f32.xlu0 %v311
  %v313 = vpop.xlane.xlu0 %312
  %v314 = vsub.f32 %v305, %v310
  %v315 = vsub.f32 %v306, %v313
  %v316 = vmul.f32 %v314, 1.442695
  %v317 = vpow.pop %v316
  %v318 = vmul.f32 %v315, 1.442695
  %v319 = vpow.pop %v318
  %v320 = vsel %vm307, %v317, 0.0
  %321 = vadd.xlane.f32.xlu0 %v320
  %v322 = vpop.xlane.xlu0 %321
  %v323 = vsel %vm307, %v319, 0.0
  %324 = vadd.xlane.f32.xlu0 %v323
  %v325 = vpop.xlane.xlu0 %324
  %v326 = vrcp.pop %v322
  %v327 = vrcp.pop %v325
  %v328 = vmul.f32 %v317, %v326
  %v329 = vmul.f32 %v319, %v327
  %v330 = vpack.c.bf16 %v328, %v328
  %v331 = vpack.c.bf16 %v329, %v329
  %332 = vrot.lane.b32.xlu0 %v202, 64
  %v333 = vpop.permute.xlu0 %332
  %v335 = vsel %vm307, %v330, 0
  %vm337 = vcmask 1043456
  %v339 = vsel %vm337, %v333, 0
  %341 = vmatprep.subr.bf16.mxu0 0
  %342 = vmatpush1.bf16.msra.mxu0 %v339
  %343 = vmatprep.subr.bf16.mxu0 0
  %344 = vmatpush1.bf16.msra.mxu0 0
  %345 = vmatprep.subr.bf16.mxu0 0
  %346 = vmatpush1.bf16.msra.mxu0 0
  %347 = vmatprep.subr.bf16.mxu0 0
  %348 = vmatpush1.bf16.msra.mxu0 0
  %349 = vmatprep.subr.bf16.mxu0 0
  %350 = vmatpush1.bf16.msra.mxu0 0
  %351 = vmatprep.subr.bf16.mxu0 0
  %352 = vmatpush1.bf16.msra.mxu0 0
  %353 = vmatprep.subr.bf16.mxu0 0
  %354 = vmatpush1.bf16.msra.mxu0 0
  %355 = vmatprep.subr.bf16.mxu0 0
  %356 = vmatpush1.bf16.msra.mxu0 0
  %357 = vmatprep.subr.bf16.mxu0 0
  %358 = vmatpush1.bf16.msra.mxu0 0
  %359 = vmatprep.subr.bf16.mxu0 0
  %360 = vmatpush1.bf16.msra.mxu0 0
  %361 = vmatprep.subr.bf16.mxu0 0
  %362 = vmatpush1.bf16.msra.mxu0 0
  %363 = vmatprep.subr.bf16.mxu0 0
  %364 = vmatpush1.bf16.msra.mxu0 0
  %365 = vmatprep.subr.bf16.mxu0 0
  %366 = vmatpush1.bf16.msra.mxu0 0
  %367 = vmatprep.subr.bf16.mxu0 0
  %368 = vmatpush1.bf16.msra.mxu0 0
  %369 = vmatprep.subr.bf16.mxu0 0
  %370 = vmatpush1.bf16.msra.mxu0 0
  %371 = vmatprep.subr.bf16.mxu0 0
  %372 = vmatpush1.bf16.msra.mxu0 0
  %373 = vmatprep.mubr.bf16.mxu0 0
  %374 = vmatmul.mubr.bf16.gmra.mrb[0].mxu0 %v335
  %v375 = vpop.f32.mrb[0].mxu0
  %v376 = vadd.f32 0.0, %v375
  %v377 = vpop.f32.mrb[0].mxu0
  %v378 = vpop.f32.mrb[0].mxu0
  %v379 = vpop.f32.mrb[0].mxu0
  %380 = vdwg.mxu0
  %381 = vrot.lane.b32.xlu0 %v203, 64
  %v382 = vpop.permute.xlu0 %381
  %v384 = vsel %vm307, %v331, 0
  %v387 = vsel %vm337, %v382, 0
  %389 = vmatprep.subr.bf16.mxu0 0
  %390 = vmatpush1.bf16.msra.mxu0 %v387
  %391 = vmatprep.subr.bf16.mxu0 0
  %392 = vmatpush1.bf16.msra.mxu0 0
  %393 = vmatprep.subr.bf16.mxu0 0
  %394 = vmatpush1.bf16.msra.mxu0 0
  %395 = vmatprep.subr.bf16.mxu0 0
  %396 = vmatpush1.bf16.msra.mxu0 0
  %397 = vmatprep.subr.bf16.mxu0 0
  %398 = vmatpush1.bf16.msra.mxu0 0
  %399 = vmatprep.subr.bf16.mxu0 0
  %400 = vmatpush1.bf16.msra.mxu0 0
  %401 = vmatprep.subr.bf16.mxu0 0
  %402 = vmatpush1.bf16.msra.mxu0 0
  %403 = vmatprep.subr.bf16.mxu0 0
  %404 = vmatpush1.bf16.msra.mxu0 0
  %405 = vmatprep.subr.bf16.mxu0 0
  %406 = vmatpush1.bf16.msra.mxu0 0
  %407 = vmatprep.subr.bf16.mxu0 0
  %408 = vmatpush1.bf16.msra.mxu0 0
  %409 = vmatprep.subr.bf16.mxu0 0
  %410 = vmatpush1.bf16.msra.mxu0 0
  %411 = vmatprep.subr.bf16.mxu0 0
  %412 = vmatpush1.bf16.msra.mxu0 0
  %413 = vmatprep.subr.bf16.mxu0 0
  %414 = vmatpush1.bf16.msra.mxu0 0
  %415 = vmatprep.subr.bf16.mxu0 0
  %416 = vmatpush1.bf16.msra.mxu0 0
  %417 = vmatprep.subr.bf16.mxu0 0
  %418 = vmatpush1.bf16.msra.mxu0 0
  %419 = vmatprep.subr.bf16.mxu0 0
  %420 = vmatpush1.bf16.msra.mxu0 0
  %421 = vmatprep.mubr.bf16.mxu0 0
  %422 = vmatmul.mubr.bf16.gmra.mrb[0].mxu0 %v384
  %v423 = vpop.f32.mrb[0].mxu0
  %v424 = vadd.f32 0.0, %v423
  %v425 = vpop.f32.mrb[0].mxu0
  %v426 = vpop.f32.mrb[0].mxu0
  %v427 = vpop.f32.mrb[0].mxu0
  %428 = vdwg.mxu0
  %429 = vrot.lane.b32.xlu0 %v202, 112
  %v430 = vpop.permute.xlu0 %429
  %431 = vrot.lane.b32.xlu0 %v202, 80
  %v432 = vpop.permute.xlu0 %431
  %v434 = vsel %vm207, %v430, 0
  %v437 = vsel %vm207, %v432, 0
  %439 = vmatprep.subr.bf16.mxu0 0
  %440 = vmatpush1.bf16.xpose.msra.mxu0 %v437
  %441 = vmatprep.subr.bf16.mxu0 0
  %442 = vmatpush1.bf16.xpose.msra.mxu0 0
  %443 = vmatprep.subr.bf16.mxu0 0
  %444 = vmatpush1.bf16.xpose.msra.mxu0 0
  %445 = vmatprep.subr.bf16.mxu0 0
  %446 = vmatpush1.bf16.xpose.msra.mxu0 0
  %447 = vmatprep.subr.bf16.mxu0 0
  %448 = vmatpush1.bf16.xpose.msra.mxu0 0
  %449 = vmatprep.subr.bf16.mxu0 0
  %450 = vmatpush1.bf16.xpose.msra.mxu0 0
  %451 = vmatprep.subr.bf16.mxu0 0
  %452 = vmatpush1.bf16.xpose.msra.mxu0 0
  %453 = vmatprep.subr.bf16.mxu0 0
  %454 = vmatpush1.bf16.xpose.msra.mxu0 0
  %455 = vmatprep.subr.bf16.mxu0 0
  %456 = vmatpush1.bf16.xpose.msra.mxu0 0
  %457 = vmatprep.subr.bf16.mxu0 0
  %458 = vmatpush1.bf16.xpose.msra.mxu0 0
  %459 = vmatprep.subr.bf16.mxu0 0
  %460 = vmatpush1.bf16.xpose.msra.mxu0 0
  %461 = vmatprep.subr.bf16.mxu0 0
  %462 = vmatpush1.bf16.xpose.msra.mxu0 0
  %463 = vmatprep.subr.bf16.mxu0 0
  %464 = vmatpush1.bf16.xpose.msra.mxu0 0
  %465 = vmatprep.subr.bf16.mxu0 0
  %466 = vmatpush1.bf16.xpose.msra.mxu0 0
  %467 = vmatprep.subr.bf16.mxu0 0
  %468 = vmatpush1.bf16.xpose.msra.mxu0 0
  %469 = vmatprep.subr.bf16.mxu0 0
  %470 = vmatpush1.bf16.xpose.msra.mxu0 0
  %471 = vmatprep.mubr.bf16.mxu0 0
  %472 = vmatmul.mubr.bf16.gmra.mrb[0].mxu0 %v434
  %v473 = vpop.f32.mrb[0].mxu0
  %v474 = vadd.f32 0.0, %v473
  %v475 = vpop.f32.mrb[0].mxu0
  %v476 = vpop.f32.mrb[0].mxu0
  %v477 = vpop.f32.mrb[0].mxu0
  %478 = vdwg.mxu0
  %479 = vrot.lane.b32.xlu0 %v203, 112
  %v480 = vpop.permute.xlu0 %479
  %481 = vrot.lane.b32.xlu0 %v203, 80
  %v482 = vpop.permute.xlu0 %481
  %v484 = vsel %vm207, %v480, 0
  %v487 = vsel %vm207, %v482, 0
  %489 = vmatprep.subr.bf16.mxu0 0
  %490 = vmatpush1.bf16.xpose.msra.mxu0 %v487
  %491 = vmatprep.subr.bf16.mxu0 0
  %492 = vmatpush1.bf16.xpose.msra.mxu0 0
  %493 = vmatprep.subr.bf16.mxu0 0
  %494 = vmatpush1.bf16.xpose.msra.mxu0 0
  %495 = vmatprep.subr.bf16.mxu0 0
  %496 = vmatpush1.bf16.xpose.msra.mxu0 0
  %497 = vmatprep.subr.bf16.mxu0 0
  %498 = vmatpush1.bf16.xpose.msra.mxu0 0
  %499 = vmatprep.subr.bf16.mxu0 0
  %500 = vmatpush1.bf16.xpose.msra.mxu0 0
  %501 = vmatprep.subr.bf16.mxu0 0
  %502 = vmatpush1.bf16.xpose.msra.mxu0 0
  %503 = vmatprep.subr.bf16.mxu0 0
  %504 = vmatpush1.bf16.xpose.msra.mxu0 0
  %505 = vmatprep.subr.bf16.mxu0 0
  %506 = vmatpush1.bf16.xpose.msra.mxu0 0
  %507 = vmatprep.subr.bf16.mxu0 0
  %508 = vmatpush1.bf16.xpose.msra.mxu0 0
  %509 = vmatprep.subr.bf16.mxu0 0
  %510 = vmatpush1.bf16.xpose.msra.mxu0 0
  %511 = vmatprep.subr.bf16.mxu0 0
  %512 = vmatpush1.bf16.xpose.msra.mxu0 0
  %513 = vmatprep.subr.bf16.mxu0 0
  %514 = vmatpush1.bf16.xpose.msra.mxu0 0
  %515 = vmatprep.subr.bf16.mxu0 0
  %516 = vmatpush1.bf16.xpose.msra.mxu0 0
  %517 = vmatprep.subr.bf16.mxu0 0
  %518 = vmatpush1.bf16.xpose.msra.mxu0 0
  %519 = vmatprep.subr.bf16.mxu0 0
  %520 = vmatpush1.bf16.xpose.msra.mxu0 0
  %521 = vmatprep.mubr.bf16.mxu0 0
  %522 = vmatmul.mubr.bf16.gmra.mrb[0].mxu0 %v484
  %v523 = vpop.f32.mrb[0].mxu0
  %v524 = vadd.f32 0.0, %v523
  %v525 = vpop.f32.mrb[0].mxu0
  %v526 = vpop.f32.mrb[0].mxu0
  %v527 = vpop.f32.mrb[0].mxu0
  %528 = vdwg.mxu0
  %v529 = vmul.f32 %v474, 0.25
  %v530 = vmul.f32 %v524, 0.25
  %v531 = vadd.f32 %v529, %v200
  %v532 = vadd.f32 %v530, %v201
  %v533 = vsel %vm307, %v531, -inf
  %534 = vmax.xlane.f32.xlu0 %v533
  %v535 = vpop.xlane.xlu0 %534
  %v536 = vsel %vm307, %v532, -inf
  %537 = vmax.xlane.f32.xlu0 %v536
  %v538 = vpop.xlane.xlu0 %537
  %v539 = vsub.f32 %v531, %v535
  %v540 = vsub.f32 %v532, %v538
  %v541 = vmul.f32 %v539, 1.442695
  %v542 = vpow.pop %v541
  %v543 = vmul.f32 %v540, 1.442695
  %v544 = vpow.pop %v543
  %v545 = vsel %vm307, %v542, 0.0
  %546 = vadd.xlane.f32.xlu0 %v545
  %v547 = vpop.xlane.xlu0 %546
  %v548 = vsel %vm307, %v544, 0.0
  %549 = vadd.xlane.f32.xlu0 %v548
  %v550 = vpop.xlane.xlu0 %549
  %v551 = vrcp.pop %v547
  %v552 = vrcp.pop %v550
  %v553 = vmul.f32 %v542, %v551
  %v554 = vmul.f32 %v544, %v552
  %v555 = vpack.c.bf16 %v553, %v553
  %v556 = vpack.c.bf16 %v554, %v554
  %557 = vrot.lane.b32.xlu0 %v202, 48
  %v558 = vpop.permute.xlu0 %557
  %v560 = vsel %vm307, %v555, 0
  %v563 = vsel %vm337, %v558, 0
  %565 = vmatprep.subr.bf16.mxu0 0
  %566 = vmatpush1.bf16.msra.mxu0 %v563
  %567 = vmatprep.subr.bf16.mxu0 0
  %568 = vmatpush1.bf16.msra.mxu0 0
  %569 = vmatprep.subr.bf16.mxu0 0
  %570 = vmatpush1.bf16.msra.mxu0 0
  %571 = vmatprep.subr.bf16.mxu0 0
  %572 = vmatpush1.bf16.msra.mxu0 0
  %573 = vmatprep.subr.bf16.mxu0 0
  %574 = vmatpush1.bf16.msra.mxu0 0
  %575 = vmatprep.subr.bf16.mxu0 0
  %576 = vmatpush1.bf16.msra.mxu0 0
  %577 = vmatprep.subr.bf16.mxu0 0
  %578 = vmatpush1.bf16.msra.mxu0 0
  %579 = vmatprep.subr.bf16.mxu0 0
  %580 = vmatpush1.bf16.msra.mxu0 0
  %581 = vmatprep.subr.bf16.mxu0 0
  %582 = vmatpush1.bf16.msra.mxu0 0
  %583 = vmatprep.subr.bf16.mxu0 0
  %584 = vmatpush1.bf16.msra.mxu0 0
  %585 = vmatprep.subr.bf16.mxu0 0
  %586 = vmatpush1.bf16.msra.mxu0 0
  %587 = vmatprep.subr.bf16.mxu0 0
  %588 = vmatpush1.bf16.msra.mxu0 0
  %589 = vmatprep.subr.bf16.mxu0 0
  %590 = vmatpush1.bf16.msra.mxu0 0
  %591 = vmatprep.subr.bf16.mxu0 0
  %592 = vmatpush1.bf16.msra.mxu0 0
  %593 = vmatprep.subr.bf16.mxu0 0
  %594 = vmatpush1.bf16.msra.mxu0 0
  %595 = vmatprep.subr.bf16.mxu0 0
  %596 = vmatpush1.bf16.msra.mxu0 0
  %597 = vmatprep.mubr.bf16.mxu0 0
  %598 = vmatmul.mubr.bf16.gmra.mrb[0].mxu0 %v560
  %v599 = vpop.f32.mrb[0].mxu0
  %v600 = vadd.f32 0.0, %v599
  %v601 = vpop.f32.mrb[0].mxu0
  %v602 = vpop.f32.mrb[0].mxu0
  %v603 = vpop.f32.mrb[0].mxu0
  %604 = vdwg.mxu0
  %605 = vrot.lane.b32.xlu0 %v203, 48
  %v606 = vpop.permute.xlu0 %605
  %v608 = vsel %vm307, %v556, 0
  %v611 = vsel %vm337, %v606, 0
  %613 = vmatprep.subr.bf16.mxu0 0
  %614 = vmatpush1.bf16.msra.mxu0 %v611
  %615 = vmatprep.subr.bf16.mxu0 0
  %616 = vmatpush1.bf16.msra.mxu0 0
  %617 = vmatprep.subr.bf16.mxu0 0
  %618 = vmatpush1.bf16.msra.mxu0 0
  %619 = vmatprep.subr.bf16.mxu0 0
  %620 = vmatpush1.bf16.msra.mxu0 0
  %621 = vmatprep.subr.bf16.mxu0 0
  %622 = vmatpush1.bf16.msra.mxu0 0
  %623 = vmatprep.subr.bf16.mxu0 0
  %624 = vmatpush1.bf16.msra.mxu0 0
  %625 = vmatprep.subr.bf16.mxu0 0
  %626 = vmatpush1.bf16.msra.mxu0 0
  %627 = vmatprep.subr.bf16.mxu0 0
  %628 = vmatpush1.bf16.msra.mxu0 0
  %629 = vmatprep.subr.bf16.mxu0 0
  %630 = vmatpush1.bf16.msra.mxu0 0
  %631 = vmatprep.subr.bf16.mxu0 0
  %632 = vmatpush1.bf16.msra.mxu0 0
  %633 = vmatprep.subr.bf16.mxu0 0
  %634 = vmatpush1.bf16.msra.mxu0 0
  %635 = vmatprep.subr.bf16.mxu0 0
  %636 = vmatpush1.bf16.msra.mxu0 0
  %637 = vmatprep.subr.bf16.mxu0 0
  %638 = vmatpush1.bf16.msra.mxu0 0
  %639 = vmatprep.subr.bf16.mxu0 0
  %640 = vmatpush1.bf16.msra.mxu0 0
  %641 = vmatprep.subr.bf16.mxu0 0
  %642 = vmatpush1.bf16.msra.mxu0 0
  %643 = vmatprep.subr.bf16.mxu0 0
  %644 = vmatpush1.bf16.msra.mxu0 0
  %645 = vmatprep.mubr.bf16.mxu0 0
  %646 = vmatmul.mubr.bf16.gmra.mrb[0].mxu0 %v608
  %v647 = vpop.f32.mrb[0].mxu0
  %v648 = vadd.f32 0.0, %v647
  %v649 = vpop.f32.mrb[0].mxu0
  %v650 = vpop.f32.mrb[0].mxu0
  %v651 = vpop.f32.mrb[0].mxu0
  %652 = vdwg.mxu0
  %655 = vrot.lane.b32.xlu0 %v600, 16
  %v656 = vpop.permute.xlu0 %655
  %657 = vrot.lane.b32.xlu0 %v648, 16
  %v658 = vpop.permute.xlu0 %657
  %v661 = vsel %vm207, %v376, %v656
  %v662 = vsel %vm207, %v424, %v658
  %v663 = vpack.c.bf16 %v662, %v661
  %v664 = vld [vmem:[%s4] sm:$0xf]
  %v665 = vld [vmem:[%s4 + $0x4] sm:$0xf]
  %v666 = vld [vmem:[%s4 + $0x8] sm:$0xf]
  %v667 = vld [vmem:[%s4 + $0xc] sm:$0xf]
  %v668 = vlaneseq
  %v669 = vshrl.u32 %v668, 7
  %v670 = vsub.s32 3, %v669
  %v671 = vrot.slane %v38, %v670
  %v676 = vunpack.c.l.b16 %v664
  %v677 = vunpack.c.l.b16 %v665
  %v678 = vunpack.c.l.b16 %v666
  %v679 = vunpack.c.l.b16 %v667
  %v680 = vpack.c.b16 %v677, %v676
  %v681 = vpack.c.b16 %v679, %v678
  %vm684 = vcmask 261120
  %v686 = vsel %vm684, %v663, 0
  %688 = vmatprep.subr.bf16.mxu0 0
  %689 = vmatpush1.bf16.msra.mxu0 %v680
  %690 = vmatprep.subr.bf16.mxu0 0
  %691 = vmatpush1.bf16.msra.mxu0 %v681
  %692 = vmatprep.subr.bf16.mxu0 0
  %693 = vmatpush1.bf16.msra.mxu0 0
  %694 = vmatprep.subr.bf16.mxu0 0
  %695 = vmatpush1.bf16.msra.mxu0 0
  %696 = vmatprep.subr.bf16.mxu0 0
  %697 = vmatpush1.bf16.msra.mxu0 0
  %698 = vmatprep.subr.bf16.mxu0 0
  %699 = vmatpush1.bf16.msra.mxu0 0
  %700 = vmatprep.subr.bf16.mxu0 0
  %701 = vmatpush1.bf16.msra.mxu0 0
  %702 = vmatprep.subr.bf16.mxu0 0
  %703 = vmatpush1.bf16.msra.mxu0 0
  %704 = vmatprep.subr.bf16.mxu0 0
  %705 = vmatpush1.bf16.msra.mxu0 0
  %706 = vmatprep.subr.bf16.mxu0 0
  %707 = vmatpush1.bf16.msra.mxu0 0
  %708 = vmatprep.subr.bf16.mxu0 0
  %709 = vmatpush1.bf16.msra.mxu0 0
  %710 = vmatprep.subr.bf16.mxu0 0
  %711 = vmatpush1.bf16.msra.mxu0 0
  %712 = vmatprep.subr.bf16.mxu0 0
  %713 = vmatpush1.bf16.msra.mxu0 0
  %714 = vmatprep.subr.bf16.mxu0 0
  %715 = vmatpush1.bf16.msra.mxu0 0
  %716 = vmatprep.subr.bf16.mxu0 0
  %717 = vmatpush1.bf16.msra.mxu0 0
  %718 = vmatprep.subr.bf16.mxu0 0
  %719 = vmatpush1.bf16.msra.mxu0 0
  %720 = vmatprep.mubr.bf16.mxu0 0
  %721 = vmatmul.mubr.bf16.gmra.mrb[0].mxu0 %v686
  %v722 = vpop.f32.mrb[0].mxu0
  %v723 = vadd.f32 %v671, %v722
  %v724 = vpop.f32.mrb[0].mxu0
  %v725 = vpop.f32.mrb[0].mxu0
  %v726 = vadd.f32 %v671, %v725
  %v727 = vpop.f32.mrb[0].mxu0
  %728 = vdwg.mxu0
  %v729 = vadd.f32 %v81, %v723
  %v730 = vadd.f32 %v82, %v726
  %731 = vadd.xlane.f32.xlu0 %v729
  %v732 = vpop.xlane.xlu0 %731
  %733 = vadd.xlane.f32.xlu0 %v730
  %v734 = vpop.xlane.xlu0 %733
  %v735 = vmul.f32 %v732, 0.03125
  %v736 = vmul.f32 %v734, 0.03125
  %v737 = vsub.f32 %v729, %v735
  %v738 = vsub.f32 %v730, %v736
  %v739 = vmul.f32 %v737, %v44
  %v740 = vmul.f32 %v738, %v44
  %v741 = vmul.f32 %v739, %v739
  %v742 = vmul.f32 %v740, %v740
  %743 = vadd.xlane.f32.xlu0 %v741
  %v744 = vpop.xlane.xlu0 %743
  %745 = vadd.xlane.f32.xlu0 %v742
  %v746 = vpop.xlane.xlu0 %745
  %v747 = vmul.f32 %v744, 0.03125
  %v748 = vmul.f32 %v746, 0.03125
  %v749 = vadd.f32 %v747, 1e-12
  %v750 = vadd.f32 %v748, 1e-12
  %v751 = vrsqrt.pop %v749
  %v752 = vrsqrt.pop %v750
  %v753 = vmul.f32 %v739, %v751
  %v754 = vmul.f32 %v740, %v752
  %v755 = vlaneseq
  %v756 = vshrl.u32 %v755, 7
  %v757 = vsub.s32 4, %v756
  %v758 = vrot.slane %v38, %v757
  %v759 = vmul.f32 %v753, %v758
  %v760 = vmul.f32 %v754, %v758
  %v761 = vlaneseq
  %v762 = vshrl.u32 %v761, 7
  %v763 = vsub.s32 5, %v762
  %v764 = vrot.slane %v38, %v763
  %v765 = vadd.f32 %v759, %v764
  %v766 = vadd.f32 %v760, %v764
  %v767 = vpack.c.bf16 %v766, %v765
  %v768 = vld [vmem:[%s5] sm:$0xf]
  %v769 = vld [vmem:[%s5 + $0x4] sm:$0xf]
  %v770 = vld [vmem:[%s5 + $0x8] sm:$0xf]
  %v771 = vld [vmem:[%s5 + $0xc] sm:$0xf]
  %v772 = vld [vmem:[%s5 + $0x10] sm:$0xf]
  %v773 = vld [vmem:[%s5 + $0x14] sm:$0xf]
  %v774 = vld [vmem:[%s5 + $0x18] sm:$0xf]
  %v775 = vld [vmem:[%s5 + $0x1c] sm:$0xf]
  %v776 = vld [vmem:[%s5 + $0x20] sm:$0xf]
  %v777 = vld [vmem:[%s5 + $0x24] sm:$0xf]
  %v778 = vld [vmem:[%s5 + $0x28] sm:$0xf]
  %v779 = vld [vmem:[%s5 + $0x2c] sm:$0xf]
  %v780 = vld [vmem:[%s5 + $0x30] sm:$0xf]
  %v781 = vld [vmem:[%s5 + $0x34] sm:$0xf]
  %v782 = vld [vmem:[%s5 + $0x38] sm:$0xf]
  %v783 = vld [vmem:[%s5 + $0x3c] sm:$0xf]
  %v784 = vlaneseq
  %v785 = vshrl.u32 %v784, 7
  %v786 = vsub.s32 6, %v785
  %v787 = vrot.slane %v38, %v786
  %v804 = vunpack.c.l.b16 %v768
  %v805 = vunpack.c.l.b16 %v769
  %v806 = vunpack.c.l.b16 %v770
  %v807 = vunpack.c.l.b16 %v771
  %v808 = vunpack.c.l.b16 %v772
  %v809 = vunpack.c.l.b16 %v773
  %v810 = vunpack.c.l.b16 %v774
  %v811 = vunpack.c.l.b16 %v775
  %v812 = vunpack.c.l.b16 %v776
  %v813 = vunpack.c.l.b16 %v777
  %v814 = vunpack.c.l.b16 %v778
  %v815 = vunpack.c.l.b16 %v779
  %v816 = vunpack.c.l.b16 %v780
  %v817 = vunpack.c.l.b16 %v781
  %v818 = vunpack.c.l.b16 %v782
  %v819 = vunpack.c.l.b16 %v783
  %v820 = vpack.c.b16 %v805, %v804
  %v821 = vpack.c.b16 %v807, %v806
  %v822 = vpack.c.b16 %v809, %v808
  %v823 = vpack.c.b16 %v811, %v810
  %v824 = vpack.c.b16 %v813, %v812
  %v825 = vpack.c.b16 %v815, %v814
  %v826 = vpack.c.b16 %v817, %v816
  %v827 = vpack.c.b16 %v819, %v818
  %836 = vmatprep.subr.bf16.mxu0 0
  %837 = vmatpush1.bf16.msra.mxu0 %v820
  %838 = vmatprep.subr.bf16.mxu0 0
  %839 = vmatpush1.bf16.msra.mxu0 %v821
  %840 = vmatprep.subr.bf16.mxu0 0
  %841 = vmatpush1.bf16.msra.mxu0 %v822
  %842 = vmatprep.subr.bf16.mxu0 0
  %843 = vmatpush1.bf16.msra.mxu0 %v823
  %844 = vmatprep.subr.bf16.mxu0 0
  %845 = vmatpush1.bf16.msra.mxu0 %v824
  %846 = vmatprep.subr.bf16.mxu0 0
  %847 = vmatpush1.bf16.msra.mxu0 %v825
  %848 = vmatprep.subr.bf16.mxu0 0
  %849 = vmatpush1.bf16.msra.mxu0 %v826
  %850 = vmatprep.subr.bf16.mxu0 0
  %851 = vmatpush1.bf16.msra.mxu0 %v827
  %852 = vmatprep.subr.bf16.mxu0 0
  %853 = vmatpush1.bf16.msra.mxu0 0
  %854 = vmatprep.subr.bf16.mxu0 0
  %855 = vmatpush1.bf16.msra.mxu0 0
  %856 = vmatprep.subr.bf16.mxu0 0
  %857 = vmatpush1.bf16.msra.mxu0 0
  %858 = vmatprep.subr.bf16.mxu0 0
  %859 = vmatpush1.bf16.msra.mxu0 0
  %860 = vmatprep.subr.bf16.mxu0 0
  %861 = vmatpush1.bf16.msra.mxu0 0
  %862 = vmatprep.subr.bf16.mxu0 0
  %863 = vmatpush1.bf16.msra.mxu0 0
  %864 = vmatprep.subr.bf16.mxu0 0
  %865 = vmatpush1.bf16.msra.mxu0 0
  %866 = vmatprep.subr.bf16.mxu0 0
  %867 = vmatpush1.bf16.msra.mxu0 0
  %868 = vmatprep.mubr.bf16.mxu0 0
  %869 = vmatmul.mubr.bf16.gmra.mrb[0].mxu0 %v767
  %v870 = vpop.f32.mrb[0].mxu0
  %v871 = vadd.f32 %v787, %v870
  %v872 = vpop.f32.mrb[0].mxu0
  %v873 = vpop.f32.mrb[0].mxu0
  %v874 = vadd.f32 %v787, %v873
  %v875 = vpop.f32.mrb[0].mxu0
  %876 = vdwg.mxu0
  %v877 = vmul.f32 %v871, %v871
  %v878 = vmul.f32 %v874, %v874
  %v879 = vmul.f32 %v871, %v877
  %v880 = vmul.f32 %v874, %v878
  %v881 = vmul.f32 %v879, 0.044715
  %v882 = vmul.f32 %v880, 0.044715
  %v883 = vadd.f32 %v871, %v881
  %v884 = vadd.f32 %v874, %v882
  %v885 = vmul.f32 %v883, 0.7978846
  %v886 = vmul.f32 %v884, 0.7978846
  %v887 = vtanh.pop %v885
  %v888 = vtanh.pop %v886
  %v889 = vadd.f32 %v887, 1.0
  %v890 = vadd.f32 %v888, 1.0
  %v891 = vmul.f32 %v889, 0.5
  %v892 = vmul.f32 %v890, 0.5
  %v893 = vmul.f32 %v871, %v891
  %v894 = vmul.f32 %v874, %v892
  %v895 = vpack.c.bf16 %v894, %v893
  %v896 = vld [vmem:[%s6] sm:$0xf]
  %v897 = vld [vmem:[%s6 + $0x4] sm:$0xf]
  %v898 = vld [vmem:[%s6 + $0x8] sm:$0xf]
  %v899 = vld [vmem:[%s6 + $0xc] sm:$0xf]
  %v900 = vld [vmem:[%s6 + $0x10] sm:$0xf]
  %v901 = vld [vmem:[%s6 + $0x14] sm:$0xf]
  %v902 = vld [vmem:[%s6 + $0x18] sm:$0xf]
  %v903 = vld [vmem:[%s6 + $0x1c] sm:$0xf]
  %v904 = vld [vmem:[%s6 + $0x20] sm:$0xf]
  %v905 = vld [vmem:[%s6 + $0x24] sm:$0xf]
  %v906 = vld [vmem:[%s6 + $0x28] sm:$0xf]
  %v907 = vld [vmem:[%s6 + $0x2c] sm:$0xf]
  %v908 = vld [vmem:[%s6 + $0x30] sm:$0xf]
  %v909 = vld [vmem:[%s6 + $0x34] sm:$0xf]
  %v910 = vld [vmem:[%s6 + $0x38] sm:$0xf]
  %v911 = vld [vmem:[%s6 + $0x3c] sm:$0xf]
  %v912 = vlaneseq
  %v913 = vshrl.u32 %v912, 7
  %v914 = vsub.s32 7, %v913
  %v915 = vrot.slane %v38, %v914
  %v932 = vunpack.c.l.b16 %v896
  %v933 = vunpack.c.l.b16 %v897
  %v934 = vunpack.c.l.b16 %v898
  %v935 = vunpack.c.l.b16 %v899
  %v936 = vunpack.c.l.b16 %v900
  %v937 = vunpack.c.l.b16 %v901
  %v938 = vunpack.c.l.b16 %v902
  %v939 = vunpack.c.l.b16 %v903
  %v940 = vunpack.c.l.b16 %v904
  %v941 = vunpack.c.l.b16 %v905
  %v942 = vunpack.c.l.b16 %v906
  %v943 = vunpack.c.l.b16 %v907
  %v944 = vunpack.c.l.b16 %v908
  %v945 = vunpack.c.l.b16 %v909
  %v946 = vunpack.c.l.b16 %v910
  %v947 = vunpack.c.l.b16 %v911
  %v948 = vpack.c.b16 %v933, %v932
  %v949 = vpack.c.b16 %v935, %v934
  %v950 = vpack.c.b16 %v937, %v936
  %v951 = vpack.c.b16 %v939, %v938
  %v952 = vpack.c.b16 %v941, %v940
  %v953 = vpack.c.b16 %v943, %v942
  %v954 = vpack.c.b16 %v945, %v944
  %v955 = vpack.c.b16 %v947, %v946
  %964 = vmatprep.subr.bf16.mxu0 0
  %965 = vmatpush1.bf16.msra.mxu0 %v948
  %966 = vmatprep.subr.bf16.mxu0 0
  %967 = vmatpush1.bf16.msra.mxu0 %v949
  %968 = vmatprep.subr.bf16.mxu0 0
  %969 = vmatpush1.bf16.msra.mxu0 %v950
  %970 = vmatprep.subr.bf16.mxu0 0
  %971 = vmatpush1.bf16.msra.mxu0 %v951
  %972 = vmatprep.subr.bf16.mxu0 0
  %973 = vmatpush1.bf16.msra.mxu0 %v952
  %974 = vmatprep.subr.bf16.mxu0 0
  %975 = vmatpush1.bf16.msra.mxu0 %v953
  %976 = vmatprep.subr.bf16.mxu0 0
  %977 = vmatpush1.bf16.msra.mxu0 %v954
  %978 = vmatprep.subr.bf16.mxu0 0
  %979 = vmatpush1.bf16.msra.mxu0 %v955
  %980 = vmatprep.subr.bf16.mxu0 0
  %981 = vmatpush1.bf16.msra.mxu0 0
  %982 = vmatprep.subr.bf16.mxu0 0
  %983 = vmatpush1.bf16.msra.mxu0 0
  %984 = vmatprep.subr.bf16.mxu0 0
  %985 = vmatpush1.bf16.msra.mxu0 0
  %986 = vmatprep.subr.bf16.mxu0 0
  %987 = vmatpush1.bf16.msra.mxu0 0
  %988 = vmatprep.subr.bf16.mxu0 0
  %989 = vmatpush1.bf16.msra.mxu0 0
  %990 = vmatprep.subr.bf16.mxu0 0
  %991 = vmatpush1.bf16.msra.mxu0 0
  %992 = vmatprep.subr.bf16.mxu0 0
  %993 = vmatpush1.bf16.msra.mxu0 0
  %994 = vmatprep.subr.bf16.mxu0 0
  %995 = vmatpush1.bf16.msra.mxu0 0
  %996 = vmatprep.mubr.bf16.mxu0 0
  %997 = vmatmul.mubr.bf16.gmra.mrb[0].mxu0 %v895
  %v998 = vpop.f32.mrb[0].mxu0
  %v999 = vadd.f32 %v915, %v998
  %v1000 = vpop.f32.mrb[0].mxu0
  %v1001 = vpop.f32.mrb[0].mxu0
  %v1002 = vadd.f32 %v915, %v1001
  %v1003 = vpop.f32.mrb[0].mxu0
  %1004 = vdwg.mxu0
  %v1005 = vadd.f32 %v765, %v999
  %v1006 = vadd.f32 %v766, %v1002
  %1007 = vadd.xlane.f32.xlu0 %v1005
  %v1008 = vpop.xlane.xlu0 %1007
  %1009 = vadd.xlane.f32.xlu0 %v1006
  %v1010 = vpop.xlane.xlu0 %1009
  %v1011 = vmul.f32 %v1008, 0.03125
  %v1012 = vmul.f32 %v1010, 0.03125
  %v1013 = vsub.f32 %v1005, %v1011
  %v1014 = vsub.f32 %v1006, %v1012
  %v1015 = vmul.f32 %v1013, %v44
  %v1016 = vmul.f32 %v1014, %v44
  %v1017 = vmul.f32 %v1015, %v1015
  %v1018 = vmul.f32 %v1016, %v1016
  %1019 = vadd.xlane.f32.xlu0 %v1017
  %v1020 = vpop.xlane.xlu0 %1019
  %1021 = vadd.xlane.f32.xlu0 %v1018
  %v1022 = vpop.xlane.xlu0 %1021
  %v1023 = vmul.f32 %v1020, 0.03125
  %v1024 = vmul.f32 %v1022, 0.03125
  %v1025 = vadd.f32 %v1023, 1e-12
  %v1026 = vadd.f32 %v1024, 1e-12
  %v1027 = vrsqrt.pop %v1025
  %v1028 = vrsqrt.pop %v1026
  %v1029 = vmul.f32 %v1015, %v1027
  %v1030 = vmul.f32 %v1016, %v1028
  %v1031 = vlaneseq
  %v1032 = vshrl.u32 %v1031, 7
  %v1033 = vsub.s32 0, %v1032
  %v1034 = vrot.slane %v39, %v1033
  %v1035 = vmul.f32 %v1029, %v1034
  %v1036 = vmul.f32 %v1030, %v1034
  %v1037 = vlaneseq
  %v1038 = vshrl.u32 %v1037, 7
  %v1039 = vsub.s32 1, %v1038
  %v1040 = vrot.slane %v39, %v1039
  %v1041 = vadd.f32 %v1035, %v1040
  %v1042 = vadd.f32 %v1036, %v1040
  %v1043 = vpack.c.bf16 %v1041, %v1041
  %v1044 = vpack.c.bf16 %v1042, %v1042
  %v1045 = vld [vmem:[%s7] sm:$0xf]
  %v1046 = vld [vmem:[%s7 + $0x4] sm:$0xf]
  %v1047 = vld [vmem:[%s7 + $0x8] sm:$0xf]
  %v1048 = vld [vmem:[%s7 + $0xc] sm:$0xf]
  %v1049 = vld [vmem:[%s7 + $0x10] sm:$0xf]
  %v1050 = vld [vmem:[%s7 + $0x14] sm:$0xf]
  %v1051 = vld [vmem:[%s7 + $0x18] sm:$0xf]
  %v1052 = vld [vmem:[%s7 + $0x1c] sm:$0xf]
  %v1053 = vld [vmem:[%s7 + $0x20] sm:$0xf]
  %v1054 = vld [vmem:[%s7 + $0x24] sm:$0xf]
  %v1055 = vld [vmem:[%s7 + $0x28] sm:$0xf]
  %v1056 = vld [vmem:[%s7 + $0x2c] sm:$0xf]
  %v1057 = vld [vmem:[%s7 + $0x30] sm:$0xf]
  %v1058 = vld [vmem:[%s7 + $0x34] sm:$0xf]
  %v1059 = vld [vmem:[%s7 + $0x38] sm:$0xf]
  %v1060 = vld [vmem:[%s7 + $0x3c] sm:$0xf]
  %v1061 = vlaneseq
  %v1062 = vshrl.u32 %v1061, 7
  %v1063 = vsub.s32 2, %v1062
  %v1064 = vrot.slane %v39, %v1063
  %v1067 = vunpack.c.l.b16 %v1043
  %v1068 = vunpack.c.l.b16 %v1044
  %v1069 = vrot.slane %v1068, 7
  %vm1070 = vcmask 1041409
  %v1071 = vsel %vm1070, %v1069, %v1067
  %v1072 = vpack.c.b16 %v1071, %v1071
  %v1090 = vunpack.c.l.b16 %v1045
  %v1091 = vunpack.c.l.b16 %v1046
  %v1092 = vunpack.c.l.b16 %v1047
  %v1093 = vunpack.c.l.b16 %v1048
  %v1094 = vunpack.c.l.b16 %v1049
  %v1095 = vunpack.c.l.b16 %v1050
  %v1096 = vunpack.c.l.b16 %v1051
  %v1097 = vunpack.c.l.b16 %v1052
  %v1098 = vunpack.c.l.b16 %v1053
  %v1099 = vunpack.c.l.b16 %v1054
  %v1100 = vunpack.c.l.b16 %v1055
  %v1101 = vunpack.c.l.b16 %v1056
  %v1102 = vunpack.c.l.b16 %v1057
  %v1103 = vunpack.c.l.b16 %v1058
  %v1104 = vunpack.c.l.b16 %v1059
  %v1105 = vunpack.c.l.b16 %v1060
  %v1106 = vpack.c.b16 %v1091, %v1090
  %v1107 = vpack.c.b16 %v1093, %v1092
  %v1108 = vpack.c.b16 %v1095, %v1094
  %v1109 = vpack.c.b16 %v1097, %v1096
  %v1110 = vpack.c.b16 %v1099, %v1098
  %v1111 = vpack.c.b16 %v1101, %v1100
  %v1112 = vpack.c.b16 %v1103, %v1102
  %v1113 = vpack.c.b16 %v1105, %v1104
  %1122 = vmatprep.subr.bf16.mxu0 0
  %1123 = vmatpush1.bf16.msra.mxu0 %v1106
  %1124 = vmatprep.subr.bf16.mxu0 0
  %1125 = vmatpush1.bf16.msra.mxu0 %v1107
  %1126 = vmatprep.subr.bf16.mxu0 0
  %1127 = vmatpush1.bf16.msra.mxu0 %v1108
  %1128 = vmatprep.subr.bf16.mxu0 0
  %1129 = vmatpush1.bf16.msra.mxu0 %v1109
  %1130 = vmatprep.subr.bf16.mxu0 0
  %1131 = vmatpush1.bf16.msra.mxu0 %v1110
  %1132 = vmatprep.subr.bf16.mxu0 0
  %1133 = vmatpush1.bf16.msra.mxu0 %v1111
  %1134 = vmatprep.subr.bf16.mxu0 0
  %1135 = vmatpush1.bf16.msra.mxu0 %v1112
  %1136 = vmatprep.subr.bf16.mxu0 0
  %1137 = vmatpush1.bf16.msra.mxu0 %v1113
  %1138 = vmatprep.subr.bf16.mxu0 0
  %1139 = vmatpush1.bf16.msra.mxu0 0
  %1140 = vmatprep.subr.bf16.mxu0 0
  %1141 = vmatpush1.bf16.msra.mxu0 0
  %1142 = vmatprep.subr.bf16.mxu0 0
  %1143 = vmatpush1.bf16.msra.mxu0 0
  %1144 = vmatprep.subr.bf16.mxu0 0
  %1145 = vmatpush1.bf16.msra.mxu0 0
  %1146 = vmatprep.subr.bf16.mxu0 0
  %1147 = vmatpush1.bf16.msra.mxu0 0
  %1148 = vmatprep.subr.bf16.mxu0 0
  %1149 = vmatpush1.bf16.msra.mxu0 0
  %1150 = vmatprep.subr.bf16.mxu0 0
  %1151 = vmatpush1.bf16.msra.mxu0 0
  %1152 = vmatprep.subr.bf16.mxu0 0
  %1153 = vmatpush1.bf16.msra.mxu0 0
  %1154 = vmatprep.mubr.bf16.mxu0 0
  %1155 = vmatmul.mubr.bf16.gmra.mrb[0].mxu0 %v1072
  %v1156 = vpop.f32.mrb[0].mxu0
  %v1157 = vadd.f32 %v1064, %v1156
  %v1158 = vpop.f32.mrb[0].mxu0
  %v1159 = vpop.f32.mrb[0].mxu0
  %v1160 = vpop.f32.mrb[0].mxu0
  %1161 = vdwg.mxu0
  %v1162 = vtanh.pop %v1157
  %v1163 = vpack.c.bf16 %v1162, %v1162
  %v1164 = vld [vmem:[%s8] sm:$0xf]
  %v1165 = vld [vmem:[%s8 + $0x4] sm:$0xf]
  %v1166 = vld [vmem:[%s8 + $0x8] sm:$0xf]
  %v1167 = vld [vmem:[%s8 + $0xc] sm:$0xf]
  %v1168 = vld [vmem:[%s8 + $0x10] sm:$0xf]
  %v1169 = vld [vmem:[%s8 + $0x14] sm:$0xf]
  %v1170 = vld [vmem:[%s8 + $0x18] sm:$0xf]
  %v1171 = vld [vmem:[%s8 + $0x1c] sm:$0xf]
  %v1172 = vld [vmem:[%s8 + $0x20] sm:$0xf]
  %v1173 = vld [vmem:[%s8 + $0x24] sm:$0xf]
  %v1174 = vld [vmem:[%s8 + $0x28] sm:$0xf]
  %v1175 = vld [vmem:[%s8 + $0x2c] sm:$0xf]
  %v1176 = vld [vmem:[%s8 + $0x30] sm:$0xf]
  %v1177 = vld [vmem:[%s8 + $0x34] sm:$0xf]
  %v1178 = vld [vmem:[%s8 + $0x38] sm:$0xf]
  %v1179 = vld [vmem:[%s8 + $0x3c] sm:$0xf]
  %v1180 = vlaneseq
  %v1181 = vshrl.u32 %v1180, 7
  %v1182 = vsub.s32 3, %v1181
  %v1183 = vrot.slane %v39, %v1182
  %v1200 = vunpack.c.l.b16 %v1164
  %v1201 = vunpack.c.l.b16 %v1165
  %v1202 = vunpack.c.l.b16 %v1166
  %v1203 = vunpack.c.l.b16 %v1167
  %v1204 = vunpack.c.l.b16 %v1168
  %v1205 = vunpack.c.l.b16 %v1169
  %v1206 = vunpack.c.l.b16 %v1170
  %v1207 = vunpack.c.l.b16 %v1171
  %v1208 = vunpack.c.l.b16 %v1172
  %v1209 = vunpack.c.l.b16 %v1173
  %v1210 = vunpack.c.l.b16 %v1174
  %v1211 = vunpack.c.l.b16 %v1175
  %v1212 = vunpack.c.l.b16 %v1176
  %v1213 = vunpack.c.l.b16 %v1177
  %v1214 = vunpack.c.l.b16 %v1178
  %v1215 = vunpack.c.l.b16 %v1179
  %v1216 = vpack.c.b16 %v1201, %v1200
  %v1217 = vpack.c.b16 %v1203, %v1202
  %v1218 = vpack.c.b16 %v1205, %v1204
  %v1219 = vpack.c.b16 %v1207, %v1206
  %v1220 = vpack.c.b16 %v1209, %v1208
  %v1221 = vpack.c.b16 %v1211, %v1210
  %v1222 = vpack.c.b16 %v1213, %v1212
  %v1223 = vpack.c.b16 %v1215, %v1214
  %1232 = vmatprep.subr.bf16.mxu0 0
  %1233 = vmatpush1.bf16.msra.mxu0 %v1216
  %1234 = vmatprep.subr.bf16.mxu0 0
  %1235 = vmatpush1.bf16.msra.mxu0 %v1217
  %1236 = vmatprep.subr.bf16.mxu0 0
  %1237 = vmatpush1.bf16.msra.mxu0 %v1218
  %1238 = vmatprep.subr.bf16.mxu0 0
  %1239 = vmatpush1.bf16.msra.mxu0 %v1219
  %1240 = vmatprep.subr.bf16.mxu0 0
  %1241 = vmatpush1.bf16.msra.mxu0 %v1220
  %1242 = vmatprep.subr.bf16.mxu0 0
  %1243 = vmatpush1.bf16.msra.mxu0 %v1221
  %1244 = vmatprep.subr.bf16.mxu0 0
  %1245 = vmatpush1.bf16.msra.mxu0 %v1222
  %1246 = vmatprep.subr.bf16.mxu0 0
  %1247 = vmatpush1.bf16.msra.mxu0 %v1223
  %1248 = vmatprep.subr.bf16.mxu0 0
  %1249 = vmatpush1.bf16.msra.mxu0 0
  %1250 = vmatprep.subr.bf16.mxu0 0
  %1251 = vmatpush1.bf16.msra.mxu0 0
  %1252 = vmatprep.subr.bf16.mxu0 0
  %1253 = vmatpush1.bf16.msra.mxu0 0
  %1254 = vmatprep.subr.bf16.mxu0 0
  %1255 = vmatpush1.bf16.msra.mxu0 0
  %1256 = vmatprep.subr.bf16.mxu0 0
  %1257 = vmatpush1.bf16.msra.mxu0 0
  %1258 = vmatprep.subr.bf16.mxu0 0
  %1259 = vmatpush1.bf16.msra.mxu0 0
  %1260 = vmatprep.subr.bf16.mxu0 0
  %1261 = vmatpush1.bf16.msra.mxu0 0
  %1262 = vmatprep.subr.bf16.mxu0 0
  %1263 = vmatpush1.bf16.msra.mxu0 0
  %1264 = vmatprep.mubr.bf16.mxu0 0
  %1265 = vmatmul.mubr.bf16.gmra.mrb[0].mxu0 %v1163
  %v1266 = vpop.f32.mrb[0].mxu0
  %v1267 = vadd.f32 %v1183, %v1266
  %v1268 = vpop.f32.mrb[0].mxu0
  %v1269 = vpop.f32.mrb[0].mxu0
  %v1270 = vpop.f32.mrb[0].mxu0
  %1271 = vdwg.mxu0
  %v1274 = vunpack.c.l.s4 1966171168
  %v1275 = vunpack.c.0.s8 %v1274
  %v1276 = vlaneseq
  %v1277 = vshrl.u32 %v1276, 7
  %v1278 = vsub.s32 %v1275, %v1277
  %v1279 = vrot.slane %v1267, %v1278
  %v1280 = vcombine.high %v1279, %v1279
  %v1282 = vunpack.c.l.s4 1966171168
  %v1283 = vunpack.c.0.s8 %v1282
  %v1284 = vlaneseq
  %v1285 = vshrl.u32 %v1284, 7
  %v1286 = vsub.s32 %v1283, %v1285
  %v1287 = vrot.slane %v1279, %v1286
  %v1289 = vunpack.c.l.s4 1966171168
  %v1290 = vunpack.c.0.s8 %v1289
  %v1291 = vlaneseq
  %v1292 = vshrl.u32 %v1291, 7
  %v1293 = vsub.s32 %v1290, %v1292
  %v1294 = vrot.slane %v1280, %v1293
  %v1295 = vlaneseq
  %v1296 = vshrl.u32 %v1295, 7
  %v1297 = vsub.s32 0, %v1296
  %v1298 = vrot.slane %v1287, %v1297
  %v1299 = vlaneseq
  %v1300 = vshrl.u32 %v1299, 7
  %v1301 = vsub.s32 0, %v1300
  %v1302 = vrot.slane %v1294, %v1301
  %1305 = vst [vmem:[%s9] sm:$0xff] %v1298
  %1306 = vst [vmem:[%s9 + $0x8] sm:$0xff] %v1302
  // Predicated region
  $region34: #{bert_classifier_forward.1} parent=0 // pred_check
    _
  $region35: #{bert_classifier_forward.1} parent=0 // pred_check_branch
    %1308 = sbr.rel (0) target = $region37
  $region36: #{bert_classifier_forward.1} parent=0 // pred_region
    _
  $region37: #{bert_classifier_forward.1} parent=0 // pred_fallthru
    _
  // Predicated region
  $region38: #{bert_classifier_forward.1} parent=0 // pred_check
    _
  $region39: #{bert_classifier_forward.1} parent=0 // pred_check_branch
    %1310 = sbr.rel (0) target = $region41
  $region40: #{bert_classifier_forward.1} parent=0 // pred_region
    _
  $region41: #{bert_classifier_forward.1} parent=0 // pred_fallthru
    _

</llo_original>
